<compile_context>
chip_gen: v7x
topology: tpu7x:2x2x1
jax: 0.10.0
libtpu: 0.0.40
codegen_flags: <defaults>
</compile_context>

<pallas_src>
import functools

import jax
import jax.numpy as jnp
from jax.experimental import pallas as pl
from jax.experimental.pallas import tpu as pltpu

BN_EPS = 1e-5


def esc50_kernel(x_ref, w1_ref, w2_ref, w3_ref, wres_ref,
                 bng_ref, bnb_ref, bn3g_ref, bn3b_ref,
                 o_ref, pad_scr, *, N, H, W, Cin, Cout, HP, OFF):
    R = N * HP - 2                   # rows carried through the banded matmuls
    CNT = float(N * H * W)           # elements per channel for the batch stats

    # Conv-output row r has its 3x3 window centered at scratch row r+1; it is a
    # real pixel row of image n = r // HP iff that center lies in the image's
    # interior rows [OFF, OFF+H).  Everything else is inter-image junk and is
    # masked out of the BN statistics (and never stored).
    row_in_img = jax.lax.broadcasted_iota(jnp.int32, (R, 1), 0) % HP
    valid = (row_in_img >= OFF - 1) & (row_in_img < OFF - 1 + H)

    def conv(w_ref):
        # 3x3 conv = 3 banded matmuls (dy = 0,1,2), K = W*Cin, bf16 x bf16 -> f32.
        out = None
        for dy in range(3):
            d = jnp.dot(pad_scr[dy:dy + R, :], w_ref[dy],
                        preferred_element_type=jnp.float32)
            out = d if out is None else out + d
        return out                                   # (R, W*C) f32

    def group_reduce(v, c):
        # Sum each channel over its W lane-groups with a log2(W) roll-add tree;
        # afterwards every lane of a channel holds the full per-channel sum,
        # already in the (w*c + c) lane layout, so no broadcast step is needed.
        # Uses XLU lane rotates -> no MXU weight pushes, no M=1 matmuls.
        shift, groups = c, W
        while groups > 1:
            v = v + pltpu.roll(v, shift, 1)
            shift *= 2
            groups //= 2
        return v

    def bn(y, g_ref, b_ref, c, relu):
        # Training-mode BatchNorm2d: one-pass biased batch stats over (N,H,W).
        # TODO(synk): single-pass E[x^2]-E[x]^2 can cancel for large means; use
        # a centered two-pass variant if tolerances are ever tightened.
        ym = jnp.where(valid, y, 0.0)
        st = jnp.concatenate(
            [jnp.sum(ym, axis=0, keepdims=True),
             jnp.sum(ym * ym, axis=0, keepdims=True)], axis=0)      # (2, W*c)
        st = group_reduce(st, c) * (1.0 / CNT)       # row0 = mean, row1 = E[x^2]
        mu = st[0:1, :]
        var = st[1:2, :] - mu * mu
        scale = jax.lax.rsqrt(var + BN_EPS) * g_ref[...]            # (1, W*c)
        shift = b_ref[...] - mu * scale
        z = y * scale + shift                        # lane-wise affine, f32
        return jnp.maximum(z, 0.0) if relu else z

    def store_act(z):
        # Write valid rows back into the interiors (bf16); halos stay zero.
        for n in range(N):
            base = n * HP
            pad_scr[base + OFF:base + OFF + H, :] = (
                z[base + OFF - 1:base + OFF - 1 + H, :].astype(jnp.bfloat16))

    # --- stage the (already bf16) input; zero halo / filler rows once --------
    zeros_head = jnp.zeros((OFF, W * Cin), jnp.bfloat16)
    zeros_tail = jnp.zeros((HP - OFF - H, W * Cin), jnp.bfloat16)
    for n in range(N):
        base = n * HP
        pad_scr[base:base + OFF, :] = zeros_head
        pad_scr[base + OFF + H:base + HP, :] = zeros_tail
        pad_scr[base + OFF:base + OFF + H, :] = x_ref[n * H:(n + 1) * H, :]

    # x = relu(bn(conv1(x)))
    store_act(bn(conv(w1_ref), bng_ref, bnb_ref, Cin, True))
    # x = relu(bn(conv2(x)))   (the spec reuses the same BatchNorm2d module)
    store_act(bn(conv(w2_ref), bng_ref, bnb_ref, Cin, True))
    # x = bn3(conv3(x))
    z3 = bn(conv(w3_ref), bn3g_ref, bn3b_ref, Cout, False)

    # Residual 1x1 conv (block-diagonal weight) computed last -> short live range.
    res = jnp.dot(x_ref[...], wres_ref[...],
                  preferred_element_type=jnp.float32)               # (N*H, W*Cout)

    # out = relu(x + out1), written as a lane-dense (N*H, W*Cout) slab.
    for n in range(N):
        base = n * HP
        o_ref[n * H:(n + 1) * H, :] = jnp.maximum(
            z3[base + OFF - 1:base + OFF - 1 + H, :] + res[n * H:(n + 1) * H, :],
            0.0)


def _banded_weights(k_hwio, width):
    """(3,3,Cin,Cout) HWIO kernel -> (3, width*Cin, width*Cout) banded matrices.

    band[dy][(w+dx-1)*Cin+ci, w*Cout+co] = k[dy, dx, ci, co]; taps that fall
    outside [0, width) are dropped, implementing the zero padding along w.
    """
    bands = []
    for dy in range(3):
        b = 0.0
        for dx in range(3):
            b = b + jnp.kron(jnp.eye(width, width, 1 - dx, dtype=jnp.float32),
                             k_hwio[dy, dx])
        bands.append(b)
    return jnp.stack(bands).astype(jnp.bfloat16)


def esc50_block(x_nchw, params):
    # Layout glue: NCHW (PyTorch) at the boundary; lane-dense (rows, W*C) inside.
    x = jnp.transpose(x_nchw, (0, 2, 3, 1)).astype(jnp.float32)      # NHWC
    N, H, W, Cin = x.shape
    Cout = params['w3'].shape[-1]
    assert W & (W - 1) == 0, "roll-add group reduce assumes power-of-two W"
    x2d = x.reshape(N * H, W * Cin).astype(jnp.bfloat16)             # (N*H, W*Cin)

    OFF = 2                              # interior start (even: keeps bf16
                                         # row-pair packing intact on stores)
    HP = -(-(OFF + H + 1) // 8) * 8      # 8-aligned per-image scratch stride

    w1b = _banded_weights(params['w1'], W)
    w2b = _banded_weights(params['w2'], W)
    w3b = _banded_weights(params['w3'], W)
    wresb = jnp.kron(jnp.eye(W, dtype=jnp.float32),
                     params['wres'][0, 0]).astype(jnp.bfloat16)      # block-diag 1x1

    def tile_wc(v):                      # (C,) -> (1, W*C) in the lane layout
        return jnp.tile(v.astype(jnp.float32), W)[None, :]

    vmem = pl.BlockSpec(memory_space=pltpu.MemorySpace.VMEM)
    out2d = pl.pallas_call(
        functools.partial(esc50_kernel, N=N, H=H, W=W, Cin=Cin, Cout=Cout,
                          HP=HP, OFF=OFF),
        out_shape=jax.ShapeDtypeStruct((N * H, W * Cout), jnp.float32),
        in_specs=[vmem] * 9,
        out_specs=vmem,
        scratch_shapes=[pltpu.VMEM((N * HP, W * Cin), jnp.bfloat16)],
    )(x2d, w1b, w2b, w3b, wresb,
      tile_wc(params['bn_g']), tile_wc(params['bn_b']),
      tile_wc(params['bn3_g']), tile_wc(params['bn3_b']))
    return jnp.transpose(out2d.reshape(N, H, W, Cout), (0, 3, 1, 2))  # back to NCHW


def init_params(key, in_channels, conv_channels):
    # Deterministic synthetic init mirroring the module's __init__ scales.
    k1, k2, k3, k4 = jax.random.split(key, 4)
    fan3 = in_channels * 9
    # conv1: kaiming_normal_(nonlinearity='relu') -> std = sqrt(2 / fan_in)
    w1 = jax.random.normal(k1, (3, 3, in_channels, in_channels), jnp.float32) \
        * jnp.sqrt(2.0 / fan3)
    # conv2/conv3/conv_res: PyTorch default ~ U(-1/sqrt(fan_in), 1/sqrt(fan_in))
    w2 = jax.random.uniform(k2, (3, 3, in_channels, in_channels), jnp.float32,
                            -1.0 / jnp.sqrt(fan3), 1.0 / jnp.sqrt(fan3))
    w3 = jax.random.uniform(k3, (3, 3, in_channels, conv_channels), jnp.float32,
                            -1.0 / jnp.sqrt(fan3), 1.0 / jnp.sqrt(fan3))
    wres = jax.random.uniform(k4, (1, 1, in_channels, conv_channels), jnp.float32,
                              -1.0 / jnp.sqrt(in_channels), 1.0 / jnp.sqrt(in_channels))
    return dict(
        w1=w1, w2=w2, w3=w3, wres=wres,                       # HWIO weight layout
        bn_g=jnp.full((in_channels,), 0.5, jnp.float32),      # constant_(weight, 0.5)
        bn_b=jnp.zeros((in_channels,), jnp.float32),          # zeros_(bias)
        bn3_g=jnp.ones((conv_channels,), jnp.float32),
        bn3_b=jnp.zeros((conv_channels,), jnp.float32),
    )


def reference(x_nchw, params, dot_dtype=jnp.float32):
    # Pure-JAX reference (correctness check only).  dot_dtype=bfloat16 mirrors
    # the kernel's bf16 MXU operands; float32 is the module's exact semantics.
    x = jnp.transpose(x_nchw, (0, 2, 3, 1)).astype(jnp.float32)

    def conv(v, w, pad):
        return jax.lax.conv_general_dilated(
            v.astype(dot_dtype), w.astype(dot_dtype),
            window_strides=(1, 1), padding=[(pad, pad), (pad, pad)],
            dimension_numbers=('NHWC', 'HWIO', 'NHWC'),
            preferred_element_type=jnp.float32)

    def bn(v, g, b):
        mu = jnp.mean(v, axis=(0, 1, 2), keepdims=True)
        var = jnp.mean(jnp.square(v - mu), axis=(0, 1, 2), keepdims=True)
        return (v - mu) * jax.lax.rsqrt(var + BN_EPS) * g + b

    out1 = conv(x, params['wres'], 0)
    h = jax.nn.relu(bn(conv(x, params['w1'], 1), params['bn_g'], params['bn_b']))
    h = jax.nn.relu(bn(conv(h, params['w2'], 1), params['bn_g'], params['bn_b']))
    h = bn(conv(h, params['w3'], 1), params['bn3_g'], params['bn3_b'])
    return jnp.transpose(jax.nn.relu(h + out1), (0, 3, 1, 2))


if __name__ == "__main__":
    key = jax.random.PRNGKey(0)
    kx, kp = jax.random.split(key)
    in_channels, conv_channels = 8, 16          # W*Cin = 128, W*Cout = 256 lanes
    x = jax.random.normal(kx, (2, in_channels, 16, 16), jnp.float32)  # NCHW input
    params = init_params(kp, in_channels, conv_channels)

    out = jax.block_until_ready(esc50_block(x, params))
    assert out.shape == (2, conv_channels, 16, 16), out.shape

    # Tight check vs a reference that matches the kernel's bf16 matmul precision,
    # loose check vs the pure-f32 module semantics (bf16 MXU operands ~1e-2).
    ref_bf16 = reference(x, params, jnp.bfloat16)
    ref_f32 = reference(x, params, jnp.float32)
    err_bf16 = float(jnp.max(jnp.abs(out - ref_bf16)))
    err_f32 = float(jnp.max(jnp.abs(out - ref_f32)))
    assert jnp.allclose(out, ref_bf16, atol=5e-3, rtol=5e-3), err_bf16
    assert jnp.allclose(out, ref_f32, atol=5e-2, rtol=5e-2), err_f32
    print("KERNEL_OK")
</pallas_src>

<mosaic_0001>
module attributes {stable_mosaic.version = 11 : i64} {
  func.func @esc50_kernel(%arg0: memref<32x128xbf16, #tpu.memory_space<vmem>>, %arg1: memref<3x128x128xbf16, #tpu.memory_space<vmem>>, %arg2: memref<3x128x128xbf16, #tpu.memory_space<vmem>>, %arg3: memref<3x128x256xbf16, #tpu.memory_space<vmem>>, %arg4: memref<128x256xbf16, #tpu.memory_space<vmem>>, %arg5: memref<1x128xf32, #tpu.memory_space<vmem>>, %arg6: memref<1x128xf32, #tpu.memory_space<vmem>>, %arg7: memref<1x256xf32, #tpu.memory_space<vmem>>, %arg8: memref<1x256xf32, #tpu.memory_space<vmem>>, %arg9: memref<32x256xf32, #tpu.memory_space<vmem>>, %arg10: memref<48x128xbf16, #tpu.memory_space<vmem>>) attributes {dimension_semantics = [], scalar_prefetch = 0 : i64, scratch_operands = 1 : i64, tpu.core_type = #tpu.core_type<tc>} {
    %0 = tpu.iota {dimensions = array<i32: 0>} : vector<46x1xi32>
    %c24_i32 = arith.constant 24 : i32
    %c0_i32 = arith.constant 0 : i32
    %1 = arith.cmpi eq, %c24_i32, %c0_i32 : i32
    %c1_i32 = arith.constant 1 : i32
    %2 = arith.select %1, %c1_i32, %c24_i32 : i32
    %3 = vector.broadcast %2 : i32 to vector<46x1xi32>
    %4 = arith.remsi %0, %3 : vector<46x1xi32>
    %c0_i32_0 = arith.constant 0 : i32
    %5 = vector.broadcast %c0_i32_0 : i32 to vector<46x1xi32>
    %6 = arith.cmpi ne, %4, %5 : vector<46x1xi32>
    %c0_i32_1 = arith.constant 0 : i32
    %7 = vector.broadcast %c0_i32_1 : i32 to vector<46x1xi32>
    %8 = arith.cmpi slt, %4, %7 : vector<46x1xi32>
    %c0_i32_2 = arith.constant 0 : i32
    %9 = arith.cmpi slt, %2, %c0_i32_2 : i32
    %10 = vector.broadcast %9 : i1 to vector<46x1xi1>
    %11 = vector.broadcast %10 : vector<46x1xi1> to vector<46x1xi1>
    %12 = arith.xori %8, %11 : vector<46x1xi1>
    %13 = arith.andi %12, %6 : vector<46x1xi1>
    %14 = vector.broadcast %2 : i32 to vector<46x1xi32>
    %15 = arith.addi %4, %14 : vector<46x1xi32>
    %16 = arith.select %13, %15, %4 : vector<46x1xi1>, vector<46x1xi32>
    %c1_i32_3 = arith.constant 1 : i32
    %17 = vector.broadcast %c1_i32_3 : i32 to vector<46x1xi32>
    %18 = arith.cmpi sge, %16, %17 : vector<46x1xi32>
    %c17_i32 = arith.constant 17 : i32
    %19 = vector.broadcast %c17_i32 : i32 to vector<46x1xi32>
    %20 = arith.cmpi slt, %16, %19 : vector<46x1xi32>
    %21 = arith.andi %18, %20 : vector<46x1xi1>
    %cst = arith.constant 0.000000e+00 : bf16
    %22 = vector.broadcast %cst : bf16 to vector<2x128xbf16>
    %cst_4 = arith.constant 0.000000e+00 : bf16
    %23 = vector.broadcast %cst_4 : bf16 to vector<6x128xbf16>
    %c0 = arith.constant 0 : index
    %c0_5 = arith.constant 0 : index
    %24 = vector.load %arg10[%c0, %c0_5] : memref<48x128xbf16, #tpu.memory_space<vmem>>, vector<2x128xbf16>
    tpu.vector_store %arg10[%c0, %c0_5], %22 {strides = array<i32>} : memref<48x128xbf16, #tpu.memory_space<vmem>>, vector<2x128xbf16>,
    %c18 = arith.constant 18 : index
    %c0_6 = arith.constant 0 : index
    %25 = vector.load %arg10[%c18, %c0_6] : memref<48x128xbf16, #tpu.memory_space<vmem>>, vector<6x128xbf16>
    tpu.vector_store %arg10[%c18, %c0_6], %23 {strides = array<i32>} : memref<48x128xbf16, #tpu.memory_space<vmem>>, vector<6x128xbf16>,
    %c0_7 = arith.constant 0 : index
    %c0_8 = arith.constant 0 : index
    %26 = vector.load %arg0[%c0_7, %c0_8] : memref<32x128xbf16, #tpu.memory_space<vmem>>, vector<16x128xbf16>
    %c2 = arith.constant 2 : index
    %c0_9 = arith.constant 0 : index
    %27 = vector.load %arg10[%c2, %c0_9] : memref<48x128xbf16, #tpu.memory_space<vmem>>, vector<16x128xbf16>
    tpu.vector_store %arg10[%c2, %c0_9], %26 {strides = array<i32>} : memref<48x128xbf16, #tpu.memory_space<vmem>>, vector<16x128xbf16>,
    %c24 = arith.constant 24 : index
    %c0_10 = arith.constant 0 : index
    %28 = vector.load %arg10[%c24, %c0_10] : memref<48x128xbf16, #tpu.memory_space<vmem>>, vector<2x128xbf16>
    tpu.vector_store %arg10[%c24, %c0_10], %22 {strides = array<i32>} : memref<48x128xbf16, #tpu.memory_space<vmem>>, vector<2x128xbf16>,
    %c42 = arith.constant 42 : index
    %c0_11 = arith.constant 0 : index
    %29 = vector.load %arg10[%c42, %c0_11] : memref<48x128xbf16, #tpu.memory_space<vmem>>, vector<6x128xbf16>
    tpu.vector_store %arg10[%c42, %c0_11], %23 {strides = array<i32>} : memref<48x128xbf16, #tpu.memory_space<vmem>>, vector<6x128xbf16>,
    %c16 = arith.constant 16 : index
    %c0_12 = arith.constant 0 : index
    %30 = vector.load %arg0[%c16, %c0_12] : memref<32x128xbf16, #tpu.memory_space<vmem>>, vector<16x128xbf16>
    %c26 = arith.constant 26 : index
    %c0_13 = arith.constant 0 : index
    %31 = vector.load %arg10[%c26, %c0_13] : memref<48x128xbf16, #tpu.memory_space<vmem>>, vector<16x128xbf16>
    tpu.vector_store %arg10[%c26, %c0_13], %30 {strides = array<i32>} : memref<48x128xbf16, #tpu.memory_space<vmem>>, vector<16x128xbf16>,
    %c0_14 = arith.constant 0 : index
    %c0_15 = arith.constant 0 : index
    %32 = vector.load %arg10[%c0_14, %c0_15] : memref<48x128xbf16, #tpu.memory_space<vmem>>, vector<46x128xbf16>
    %c0_16 = arith.constant 0 : index
    %c0_17 = arith.constant 0 : index
    %c0_18 = arith.constant 0 : index
    %33 = vector.load %arg1[%c0_16, %c0_17, %c0_18] : memref<3x128x128xbf16, #tpu.memory_space<vmem>>, vector<1x128x128xbf16>
    %34 = vector.shape_cast %33 : vector<1x128x128xbf16> to vector<128x128xbf16>
    %cst_19 = arith.constant dense<0.000000e+00> : vector<46x128xf32>
    %35 = tpu.matmul %32, %34, %cst_19 {dimension_numbers = #tpu.dot_dimension_numbers<[1], [0], [0], [1], [0, 0, 1, 1], [], []>} : vector<46x128xbf16>, vector<128x128xbf16>, vector<46x128xf32> -> vector<46x128xf32>
    %c1 = arith.constant 1 : index
    %c0_20 = arith.constant 0 : index
    %36 = vector.load %arg10[%c1, %c0_20] : memref<48x128xbf16, #tpu.memory_space<vmem>>, vector<46x128xbf16>
    %c1_21 = arith.constant 1 : index
    %c0_22 = arith.constant 0 : index
    %c0_23 = arith.constant 0 : index
    %37 = vector.load %arg1[%c1_21, %c0_22, %c0_23] : memref<3x128x128xbf16, #tpu.memory_space<vmem>>, vector<1x128x128xbf16>
    %38 = vector.shape_cast %37 : vector<1x128x128xbf16> to vector<128x128xbf16>
    %cst_24 = arith.constant dense<0.000000e+00> : vector<46x128xf32>
    %39 = tpu.matmul %36, %38, %cst_24 {dimension_numbers = #tpu.dot_dimension_numbers<[1], [0], [0], [1], [0, 0, 1, 1], [], []>} : vector<46x128xbf16>, vector<128x128xbf16>, vector<46x128xf32> -> vector<46x128xf32>
    %40 = arith.addf %35, %39 : vector<46x128xf32>
    %c2_25 = arith.constant 2 : index
    %c0_26 = arith.constant 0 : index
    %41 = vector.load %arg10[%c2_25, %c0_26] : memref<48x128xbf16, #tpu.memory_space<vmem>>, vector<46x128xbf16>
    %c2_27 = arith.constant 2 : index
    %c0_28 = arith.constant 0 : index
    %c0_29 = arith.constant 0 : index
    %42 = vector.load %arg1[%c2_27, %c0_28, %c0_29] : memref<3x128x128xbf16, #tpu.memory_space<vmem>>, vector<1x128x128xbf16>
    %43 = vector.shape_cast %42 : vector<1x128x128xbf16> to vector<128x128xbf16>
    %cst_30 = arith.constant dense<0.000000e+00> : vector<46x128xf32>
    %44 = tpu.matmul %41, %43, %cst_30 {dimension_numbers = #tpu.dot_dimension_numbers<[1], [0], [0], [1], [0, 0, 1, 1], [], []>} : vector<46x128xbf16>, vector<128x128xbf16>, vector<46x128xf32> -> vector<46x128xf32>
    %45 = arith.addf %40, %44 : vector<46x128xf32>
    %cst_31 = arith.constant 0.000000e+00 : f32
    %46 = vector.shape_cast %21 : vector<46x1xi1> to vector<46x1xi1>
    %47 = vector.broadcast %46 : vector<46x1xi1> to vector<46x128xi1>
    %48 = vector.broadcast %cst_31 : f32 to vector<46x128xf32>
    %49 = arith.select %47, %45, %48 : vector<46x128xi1>, vector<46x128xf32>
    %cst_32 = arith.constant dense<0.000000e+00> : vector<128xf32>
    %50 = vector.multi_reduction <add>, %49, %cst_32 [0] : vector<46x128xf32> to vector<128xf32>
    %51 = vector.shape_cast %50 : vector<128xf32> to vector<1x128xf32>
    %52 = arith.mulf %49, %49 : vector<46x128xf32>
    %cst_33 = arith.constant dense<0.000000e+00> : vector<128xf32>
    %53 = vector.multi_reduction <add>, %52, %cst_33 [0] : vector<46x128xf32> to vector<128xf32>
    %54 = vector.shape_cast %53 : vector<128xf32> to vector<1x128xf32>
    %55 = tpu.concatenate %51, %54 in 0 : vector<1x128xf32>, vector<1x128xf32> -> vector<2x128xf32>
    %c8_i32 = arith.constant 8 : i32
    %56 = tpu.dynamic_rotate %55 by %c8_i32 dim 1 : vector<2x128xf32>, i32 -> vector<2x128xf32>
    %57 = arith.addf %55, %56 : vector<2x128xf32>
    %c16_i32 = arith.constant 16 : i32
    %58 = tpu.dynamic_rotate %57 by %c16_i32 dim 1 : vector<2x128xf32>, i32 -> vector<2x128xf32>
    %59 = arith.addf %57, %58 : vector<2x128xf32>
    %c32_i32 = arith.constant 32 : i32
    %60 = tpu.dynamic_rotate %59 by %c32_i32 dim 1 : vector<2x128xf32>, i32 -> vector<2x128xf32>
    %61 = arith.addf %59, %60 : vector<2x128xf32>
    %c64_i32 = arith.constant 64 : i32
    %62 = tpu.dynamic_rotate %61 by %c64_i32 dim 1 : vector<2x128xf32>, i32 -> vector<2x128xf32>
    %63 = arith.addf %61, %62 : vector<2x128xf32>
    %cst_34 = arith.constant 0.001953125 : f32
    %64 = vector.broadcast %cst_34 : f32 to vector<2x128xf32>
    %65 = arith.mulf %63, %64 : vector<2x128xf32>
    %66 = vector.extract_strided_slice %65 {offsets = [0, 0], sizes = [1, 128], strides = [1, 1]} : vector<2x128xf32> to vector<1x128xf32>
    %67 = vector.extract_strided_slice %65 {offsets = [1, 0], sizes = [1, 128], strides = [1, 1]} : vector<2x128xf32> to vector<1x128xf32>
    %68 = arith.mulf %66, %66 : vector<1x128xf32>
    %69 = arith.subf %67, %68 : vector<1x128xf32>
    %cst_35 = arith.constant 9.99999974E-6 : f32
    %70 = vector.broadcast %cst_35 : f32 to vector<1x128xf32>
    %71 = arith.addf %69, %70 : vector<1x128xf32>
    %72 = math.rsqrt %71 : vector<1x128xf32>
    %c0_36 = arith.constant 0 : index
    %c0_37 = arith.constant 0 : index
    %73 = vector.load %arg5[%c0_36, %c0_37] : memref<1x128xf32, #tpu.memory_space<vmem>>, vector<1x128xf32>
    %74 = arith.mulf %72, %73 : vector<1x128xf32>
    %c0_38 = arith.constant 0 : index
    %c0_39 = arith.constant 0 : index
    %75 = vector.load %arg6[%c0_38, %c0_39] : memref<1x128xf32, #tpu.memory_space<vmem>>, vector<1x128xf32>
    %76 = arith.mulf %66, %74 : vector<1x128xf32>
    %77 = arith.subf %75, %76 : vector<1x128xf32>
    %78 = vector.broadcast %74 : vector<1x128xf32> to vector<46x128xf32>
    %79 = arith.mulf %45, %78 : vector<46x128xf32>
    %80 = vector.broadcast %77 : vector<1x128xf32> to vector<46x128xf32>
    %81 = arith.addf %79, %80 : vector<46x128xf32>
    %cst_40 = arith.constant 0.000000e+00 : f32
    %82 = vector.broadcast %cst_40 : f32 to vector<46x128xf32>
    %83 = arith.maximumf %81, %82 : vector<46x128xf32>
    %84 = vector.extract_strided_slice %83 {offsets = [1, 0], sizes = [16, 128], strides = [1, 1]} : vector<46x128xf32> to vector<16x128xf32>
    %85 = arith.truncf %84 : vector<16x128xf32> to vector<16x128xbf16>
    %c2_41 = arith.constant 2 : index
    %c0_42 = arith.constant 0 : index
    %86 = vector.load %arg10[%c2_41, %c0_42] : memref<48x128xbf16, #tpu.memory_space<vmem>>, vector<16x128xbf16>
    tpu.vector_store %arg10[%c2_41, %c0_42], %85 {strides = array<i32>} : memref<48x128xbf16, #tpu.memory_space<vmem>>, vector<16x128xbf16>,
    %87 = vector.extract_strided_slice %83 {offsets = [25, 0], sizes = [16, 128], strides = [1, 1]} : vector<46x128xf32> to vector<16x128xf32>
    %88 = arith.truncf %87 : vector<16x128xf32> to vector<16x128xbf16>
    %c26_43 = arith.constant 26 : index
    %c0_44 = arith.constant 0 : index
    %89 = vector.load %arg10[%c26_43, %c0_44] : memref<48x128xbf16, #tpu.memory_space<vmem>>, vector<16x128xbf16>
    tpu.vector_store %arg10[%c26_43, %c0_44], %88 {strides = array<i32>} : memref<48x128xbf16, #tpu.memory_space<vmem>>, vector<16x128xbf16>,
    %c0_45 = arith.constant 0 : index
    %c0_46 = arith.constant 0 : index
    %90 = vector.load %arg10[%c0_45, %c0_46] : memref<48x128xbf16, #tpu.memory_space<vmem>>, vector<46x128xbf16>
    %c0_47 = arith.constant 0 : index
    %c0_48 = arith.constant 0 : index
    %c0_49 = arith.constant 0 : index
    %91 = vector.load %arg2[%c0_47, %c0_48, %c0_49] : memref<3x128x128xbf16, #tpu.memory_space<vmem>>, vector<1x128x128xbf16>
    %92 = vector.shape_cast %91 : vector<1x128x128xbf16> to vector<128x128xbf16>
    %cst_50 = arith.constant dense<0.000000e+00> : vector<46x128xf32>
    %93 = tpu.matmul %90, %92, %cst_50 {dimension_numbers = #tpu.dot_dimension_numbers<[1], [0], [0], [1], [0, 0, 1, 1], [], []>} : vector<46x128xbf16>, vector<128x128xbf16>, vector<46x128xf32> -> vector<46x128xf32>
    %c1_51 = arith.constant 1 : index
    %c0_52 = arith.constant 0 : index
    %94 = vector.load %arg10[%c1_51, %c0_52] : memref<48x128xbf16, #tpu.memory_space<vmem>>, vector<46x128xbf16>
    %c1_53 = arith.constant 1 : index
    %c0_54 = arith.constant 0 : index
    %c0_55 = arith.constant 0 : index
    %95 = vector.load %arg2[%c1_53, %c0_54, %c0_55] : memref<3x128x128xbf16, #tpu.memory_space<vmem>>, vector<1x128x128xbf16>
    %96 = vector.shape_cast %95 : vector<1x128x128xbf16> to vector<128x128xbf16>
    %cst_56 = arith.constant dense<0.000000e+00> : vector<46x128xf32>
    %97 = tpu.matmul %94, %96, %cst_56 {dimension_numbers = #tpu.dot_dimension_numbers<[1], [0], [0], [1], [0, 0, 1, 1], [], []>} : vector<46x128xbf16>, vector<128x128xbf16>, vector<46x128xf32> -> vector<46x128xf32>
    %98 = arith.addf %93, %97 : vector<46x128xf32>
    %c2_57 = arith.constant 2 : index
    %c0_58 = arith.constant 0 : index
    %99 = vector.load %arg10[%c2_57, %c0_58] : memref<48x128xbf16, #tpu.memory_space<vmem>>, vector<46x128xbf16>
    %c2_59 = arith.constant 2 : index
    %c0_60 = arith.constant 0 : index
    %c0_61 = arith.constant 0 : index
    %100 = vector.load %arg2[%c2_59, %c0_60, %c0_61] : memref<3x128x128xbf16, #tpu.memory_space<vmem>>, vector<1x128x128xbf16>
    %101 = vector.shape_cast %100 : vector<1x128x128xbf16> to vector<128x128xbf16>
    %cst_62 = arith.constant dense<0.000000e+00> : vector<46x128xf32>
    %102 = tpu.matmul %99, %101, %cst_62 {dimension_numbers = #tpu.dot_dimension_numbers<[1], [0], [0], [1], [0, 0, 1, 1], [], []>} : vector<46x128xbf16>, vector<128x128xbf16>, vector<46x128xf32> -> vector<46x128xf32>
    %103 = arith.addf %98, %102 : vector<46x128xf32>
    %cst_63 = arith.constant 0.000000e+00 : f32
    %104 = vector.shape_cast %21 : vector<46x1xi1> to vector<46x1xi1>
    %105 = vector.broadcast %104 : vector<46x1xi1> to vector<46x128xi1>
    %106 = vector.broadcast %cst_63 : f32 to vector<46x128xf32>
    %107 = arith.select %105, %103, %106 : vector<46x128xi1>, vector<46x128xf32>
    %cst_64 = arith.constant dense<0.000000e+00> : vector<128xf32>
    %108 = vector.multi_reduction <add>, %107, %cst_64 [0] : vector<46x128xf32> to vector<128xf32>
    %109 = vector.shape_cast %108 : vector<128xf32> to vector<1x128xf32>
    %110 = arith.mulf %107, %107 : vector<46x128xf32>
    %cst_65 = arith.constant dense<0.000000e+00> : vector<128xf32>
    %111 = vector.multi_reduction <add>, %110, %cst_65 [0] : vector<46x128xf32> to vector<128xf32>
    %112 = vector.shape_cast %111 : vector<128xf32> to vector<1x128xf32>
    %113 = tpu.concatenate %109, %112 in 0 : vector<1x128xf32>, vector<1x128xf32> -> vector<2x128xf32>
    %c8_i32_66 = arith.constant 8 : i32
    %114 = tpu.dynamic_rotate %113 by %c8_i32_66 dim 1 : vector<2x128xf32>, i32 -> vector<2x128xf32>
    %115 = arith.addf %113, %114 : vector<2x128xf32>
    %c16_i32_67 = arith.constant 16 : i32
    %116 = tpu.dynamic_rotate %115 by %c16_i32_67 dim 1 : vector<2x128xf32>, i32 -> vector<2x128xf32>
    %117 = arith.addf %115, %116 : vector<2x128xf32>
    %c32_i32_68 = arith.constant 32 : i32
    %118 = tpu.dynamic_rotate %117 by %c32_i32_68 dim 1 : vector<2x128xf32>, i32 -> vector<2x128xf32>
    %119 = arith.addf %117, %118 : vector<2x128xf32>
    %c64_i32_69 = arith.constant 64 : i32
    %120 = tpu.dynamic_rotate %119 by %c64_i32_69 dim 1 : vector<2x128xf32>, i32 -> vector<2x128xf32>
    %121 = arith.addf %119, %120 : vector<2x128xf32>
    %cst_70 = arith.constant 0.001953125 : f32
    %122 = vector.broadcast %cst_70 : f32 to vector<2x128xf32>
    %123 = arith.mulf %121, %122 : vector<2x128xf32>
    %124 = vector.extract_strided_slice %123 {offsets = [0, 0], sizes = [1, 128], strides = [1, 1]} : vector<2x128xf32> to vector<1x128xf32>
    %125 = vector.extract_strided_slice %123 {offsets = [1, 0], sizes = [1, 128], strides = [1, 1]} : vector<2x128xf32> to vector<1x128xf32>
    %126 = arith.mulf %124, %124 : vector<1x128xf32>
    %127 = arith.subf %125, %126 : vector<1x128xf32>
    %cst_71 = arith.constant 9.99999974E-6 : f32
    %128 = vector.broadcast %cst_71 : f32 to vector<1x128xf32>
    %129 = arith.addf %127, %128 : vector<1x128xf32>
    %130 = math.rsqrt %129 : vector<1x128xf32>
    %c0_72 = arith.constant 0 : index
    %c0_73 = arith.constant 0 : index
    %131 = vector.load %arg5[%c0_72, %c0_73] : memref<1x128xf32, #tpu.memory_space<vmem>>, vector<1x128xf32>
    %132 = arith.mulf %130, %131 : vector<1x128xf32>
    %c0_74 = arith.constant 0 : index
    %c0_75 = arith.constant 0 : index
    %133 = vector.load %arg6[%c0_74, %c0_75] : memref<1x128xf32, #tpu.memory_space<vmem>>, vector<1x128xf32>
    %134 = arith.mulf %124, %132 : vector<1x128xf32>
    %135 = arith.subf %133, %134 : vector<1x128xf32>
    %136 = vector.broadcast %132 : vector<1x128xf32> to vector<46x128xf32>
    %137 = arith.mulf %103, %136 : vector<46x128xf32>
    %138 = vector.broadcast %135 : vector<1x128xf32> to vector<46x128xf32>
    %139 = arith.addf %137, %138 : vector<46x128xf32>
    %cst_76 = arith.constant 0.000000e+00 : f32
    %140 = vector.broadcast %cst_76 : f32 to vector<46x128xf32>
    %141 = arith.maximumf %139, %140 : vector<46x128xf32>
    %142 = vector.extract_strided_slice %141 {offsets = [1, 0], sizes = [16, 128], strides = [1, 1]} : vector<46x128xf32> to vector<16x128xf32>
    %143 = arith.truncf %142 : vector<16x128xf32> to vector<16x128xbf16>
    %c2_77 = arith.constant 2 : index
    %c0_78 = arith.constant 0 : index
    %144 = vector.load %arg10[%c2_77, %c0_78] : memref<48x128xbf16, #tpu.memory_space<vmem>>, vector<16x128xbf16>
    tpu.vector_store %arg10[%c2_77, %c0_78], %143 {strides = array<i32>} : memref<48x128xbf16, #tpu.memory_space<vmem>>, vector<16x128xbf16>,
    %145 = vector.extract_strided_slice %141 {offsets = [25, 0], sizes = [16, 128], strides = [1, 1]} : vector<46x128xf32> to vector<16x128xf32>
    %146 = arith.truncf %145 : vector<16x128xf32> to vector<16x128xbf16>
    %c26_79 = arith.constant 26 : index
    %c0_80 = arith.constant 0 : index
    %147 = vector.load %arg10[%c26_79, %c0_80] : memref<48x128xbf16, #tpu.memory_space<vmem>>, vector<16x128xbf16>
    tpu.vector_store %arg10[%c26_79, %c0_80], %146 {strides = array<i32>} : memref<48x128xbf16, #tpu.memory_space<vmem>>, vector<16x128xbf16>,
    %c0_81 = arith.constant 0 : index
    %c0_82 = arith.constant 0 : index
    %148 = vector.load %arg10[%c0_81, %c0_82] : memref<48x128xbf16, #tpu.memory_space<vmem>>, vector<46x128xbf16>
    %c0_83 = arith.constant 0 : index
    %c0_84 = arith.constant 0 : index
    %c0_85 = arith.constant 0 : index
    %149 = vector.load %arg3[%c0_83, %c0_84, %c0_85] : memref<3x128x256xbf16, #tpu.memory_space<vmem>>, vector<1x128x256xbf16>
    %150 = vector.shape_cast %149 : vector<1x128x256xbf16> to vector<128x256xbf16>
    %cst_86 = arith.constant dense<0.000000e+00> : vector<46x256xf32>
    %151 = tpu.matmul %148, %150, %cst_86 {dimension_numbers = #tpu.dot_dimension_numbers<[1], [0], [0], [1], [0, 0, 1, 1], [], []>} : vector<46x128xbf16>, vector<128x256xbf16>, vector<46x256xf32> -> vector<46x256xf32>
    %c1_87 = arith.constant 1 : index
    %c0_88 = arith.constant 0 : index
    %152 = vector.load %arg10[%c1_87, %c0_88] : memref<48x128xbf16, #tpu.memory_space<vmem>>, vector<46x128xbf16>
    %c1_89 = arith.constant 1 : index
    %c0_90 = arith.constant 0 : index
    %c0_91 = arith.constant 0 : index
    %153 = vector.load %arg3[%c1_89, %c0_90, %c0_91] : memref<3x128x256xbf16, #tpu.memory_space<vmem>>, vector<1x128x256xbf16>
    %154 = vector.shape_cast %153 : vector<1x128x256xbf16> to vector<128x256xbf16>
    %cst_92 = arith.constant dense<0.000000e+00> : vector<46x256xf32>
    %155 = tpu.matmul %152, %154, %cst_92 {dimension_numbers = #tpu.dot_dimension_numbers<[1], [0], [0], [1], [0, 0, 1, 1], [], []>} : vector<46x128xbf16>, vector<128x256xbf16>, vector<46x256xf32> -> vector<46x256xf32>
    %156 = arith.addf %151, %155 : vector<46x256xf32>
    %c2_93 = arith.constant 2 : index
    %c0_94 = arith.constant 0 : index
    %157 = vector.load %arg10[%c2_93, %c0_94] : memref<48x128xbf16, #tpu.memory_space<vmem>>, vector<46x128xbf16>
    %c2_95 = arith.constant 2 : index
    %c0_96 = arith.constant 0 : index
    %c0_97 = arith.constant 0 : index
    %158 = vector.load %arg3[%c2_95, %c0_96, %c0_97] : memref<3x128x256xbf16, #tpu.memory_space<vmem>>, vector<1x128x256xbf16>
    %159 = vector.shape_cast %158 : vector<1x128x256xbf16> to vector<128x256xbf16>
    %cst_98 = arith.constant dense<0.000000e+00> : vector<46x256xf32>
    %160 = tpu.matmul %157, %159, %cst_98 {dimension_numbers = #tpu.dot_dimension_numbers<[1], [0], [0], [1], [0, 0, 1, 1], [], []>} : vector<46x128xbf16>, vector<128x256xbf16>, vector<46x256xf32> -> vector<46x256xf32>
    %161 = arith.addf %156, %160 : vector<46x256xf32>
    %cst_99 = arith.constant 0.000000e+00 : f32
    %162 = vector.shape_cast %21 : vector<46x1xi1> to vector<46x1xi1>
    %163 = vector.broadcast %162 : vector<46x1xi1> to vector<46x256xi1>
    %164 = vector.broadcast %cst_99 : f32 to vector<46x256xf32>
    %165 = arith.select %163, %161, %164 : vector<46x256xi1>, vector<46x256xf32>
    %cst_100 = arith.constant dense<0.000000e+00> : vector<256xf32>
    %166 = vector.multi_reduction <add>, %165, %cst_100 [0] : vector<46x256xf32> to vector<256xf32>
    %167 = vector.shape_cast %166 : vector<256xf32> to vector<1x256xf32>
    %168 = arith.mulf %165, %165 : vector<46x256xf32>
    %cst_101 = arith.constant dense<0.000000e+00> : vector<256xf32>
    %169 = vector.multi_reduction <add>, %168, %cst_101 [0] : vector<46x256xf32> to vector<256xf32>
    %170 = vector.shape_cast %169 : vector<256xf32> to vector<1x256xf32>
    %171 = tpu.concatenate %167, %170 in 0 : vector<1x256xf32>, vector<1x256xf32> -> vector<2x256xf32>
    %c16_i32_102 = arith.constant 16 : i32
    %172 = tpu.dynamic_rotate %171 by %c16_i32_102 dim 1 : vector<2x256xf32>, i32 -> vector<2x256xf32>
    %173 = arith.addf %171, %172 : vector<2x256xf32>
    %c32_i32_103 = arith.constant 32 : i32
    %174 = tpu.dynamic_rotate %173 by %c32_i32_103 dim 1 : vector<2x256xf32>, i32 -> vector<2x256xf32>
    %175 = arith.addf %173, %174 : vector<2x256xf32>
    %c64_i32_104 = arith.constant 64 : i32
    %176 = tpu.dynamic_rotate %175 by %c64_i32_104 dim 1 : vector<2x256xf32>, i32 -> vector<2x256xf32>
    %177 = arith.addf %175, %176 : vector<2x256xf32>
    %c128_i32 = arith.constant 128 : i32
    %178 = tpu.dynamic_rotate %177 by %c128_i32 dim 1 : vector<2x256xf32>, i32 -> vector<2x256xf32>
    %179 = arith.addf %177, %178 : vector<2x256xf32>
    %cst_105 = arith.constant 0.001953125 : f32
    %180 = vector.broadcast %cst_105 : f32 to vector<2x256xf32>
    %181 = arith.mulf %179, %180 : vector<2x256xf32>
    %182 = vector.extract_strided_slice %181 {offsets = [0, 0], sizes = [1, 256], strides = [1, 1]} : vector<2x256xf32> to vector<1x256xf32>
    %183 = vector.extract_strided_slice %181 {offsets = [1, 0], sizes = [1, 256], strides = [1, 1]} : vector<2x256xf32> to vector<1x256xf32>
    %184 = arith.mulf %182, %182 : vector<1x256xf32>
    %185 = arith.subf %183, %184 : vector<1x256xf32>
    %cst_106 = arith.constant 9.99999974E-6 : f32
    %186 = vector.broadcast %cst_106 : f32 to vector<1x256xf32>
    %187 = arith.addf %185, %186 : vector<1x256xf32>
    %188 = math.rsqrt %187 : vector<1x256xf32>
    %c0_107 = arith.constant 0 : index
    %c0_108 = arith.constant 0 : index
    %189 = vector.load %arg7[%c0_107, %c0_108] : memref<1x256xf32, #tpu.memory_space<vmem>>, vector<1x256xf32>
    %190 = arith.mulf %188, %189 : vector<1x256xf32>
    %c0_109 = arith.constant 0 : index
    %c0_110 = arith.constant 0 : index
    %191 = vector.load %arg8[%c0_109, %c0_110] : memref<1x256xf32, #tpu.memory_space<vmem>>, vector<1x256xf32>
    %192 = arith.mulf %182, %190 : vector<1x256xf32>
    %193 = arith.subf %191, %192 : vector<1x256xf32>
    %194 = vector.broadcast %190 : vector<1x256xf32> to vector<46x256xf32>
    %195 = arith.mulf %161, %194 : vector<46x256xf32>
    %196 = vector.broadcast %193 : vector<1x256xf32> to vector<46x256xf32>
    %197 = arith.addf %195, %196 : vector<46x256xf32>
    %c0_111 = arith.constant 0 : index
    %c0_112 = arith.constant 0 : index
    %198 = vector.load %arg0[%c0_111, %c0_112] : memref<32x128xbf16, #tpu.memory_space<vmem>>, vector<32x128xbf16>
    %c0_113 = arith.constant 0 : index
    %c0_114 = arith.constant 0 : index
    %199 = vector.load %arg4[%c0_113, %c0_114] : memref<128x256xbf16, #tpu.memory_space<vmem>>, vector<128x256xbf16>
    %cst_115 = arith.constant dense<0.000000e+00> : vector<32x256xf32>
    %200 = tpu.matmul %198, %199, %cst_115 {dimension_numbers = #tpu.dot_dimension_numbers<[1], [0], [0], [1], [0, 0, 1, 1], [], []>} : vector<32x128xbf16>, vector<128x256xbf16>, vector<32x256xf32> -> vector<32x256xf32>
    %201 = vector.extract_strided_slice %197 {offsets = [1, 0], sizes = [16, 256], strides = [1, 1]} : vector<46x256xf32> to vector<16x256xf32>
    %202 = vector.extract_strided_slice %200 {offsets = [0, 0], sizes = [16, 256], strides = [1, 1]} : vector<32x256xf32> to vector<16x256xf32>
    %203 = arith.addf %201, %202 : vector<16x256xf32>
    %cst_116 = arith.constant 0.000000e+00 : f32
    %204 = vector.broadcast %cst_116 : f32 to vector<16x256xf32>
    %205 = arith.maximumf %203, %204 : vector<16x256xf32>
    %c0_117 = arith.constant 0 : index
    %c0_118 = arith.constant 0 : index
    %206 = vector.load %arg9[%c0_117, %c0_118] : memref<32x256xf32, #tpu.memory_space<vmem>>, vector<16x256xf32>
    tpu.vector_store %arg9[%c0_117, %c0_118], %205 {strides = array<i32>} : memref<32x256xf32, #tpu.memory_space<vmem>>, vector<16x256xf32>,
    %207 = vector.extract_strided_slice %197 {offsets = [25, 0], sizes = [16, 256], strides = [1, 1]} : vector<46x256xf32> to vector<16x256xf32>
    %208 = vector.extract_strided_slice %200 {offsets = [16, 0], sizes = [16, 256], strides = [1, 1]} : vector<32x256xf32> to vector<16x256xf32>
    %209 = arith.addf %207, %208 : vector<16x256xf32>
    %cst_119 = arith.constant 0.000000e+00 : f32
    %210 = vector.broadcast %cst_119 : f32 to vector<16x256xf32>
    %211 = arith.maximumf %209, %210 : vector<16x256xf32>
    %c16_120 = arith.constant 16 : index
    %c0_121 = arith.constant 0 : index
    %212 = vector.load %arg9[%c16_120, %c0_121] : memref<32x256xf32, #tpu.memory_space<vmem>>, vector<16x256xf32>
    tpu.vector_store %arg9[%c16_120, %c0_121], %211 {strides = array<i32>} : memref<32x256xf32, #tpu.memory_space<vmem>>, vector<16x256xf32>,
    return
  }
}

</mosaic_0001>

<llo_original>
// kernel: tpu_custom_call.1
$region0: #{tpu_custom_call.1}
  #allocation0 [shape = 'u32[]', space=smem, size = 0x4, offset = 0x4, fixed_abs, tag = 'smem constant byte address 0x4 - core index']
  #allocation1 [shape = 'u32[144,128]{1,0:T(1,128)}', space=vmem, size = 0x12000, scoped, tag = 'internal scratch']
  #allocation2 [shape = 'bf16[48,128]{1,0:T(16,128)(2,1)}', space=vmem, size = 0x3000, scoped, tag = 'scratch operand']
  %s0 = inlined_call_operand.hbm [shape: bf16[32,128], index: 0, kind: input, shape index: {}]
  %s1 = inlined_call_operand.hbm [shape: bf16[3,128,128], index: 1, kind: input, shape index: {}]
  %s2 = inlined_call_operand.hbm [shape: bf16[3,128,128], index: 2, kind: input, shape index: {}]
  %s3 = inlined_call_operand.hbm [shape: bf16[3,128,256], index: 3, kind: input, shape index: {}]
  %s4 = inlined_call_operand.hbm [shape: bf16[128,256], index: 4, kind: input, shape index: {}]
  %s5 = inlined_call_operand.vmem [shape: f32[1,128], index: 5, kind: input, shape index: {}]
  %s6 = inlined_call_operand.vmem [shape: f32[1,128], index: 6, kind: input, shape index: {}]
  %s7 = inlined_call_operand.vmem [shape: f32[1,256], index: 7, kind: input, shape index: {}]
  %s8 = inlined_call_operand.vmem [shape: f32[1,256], index: 8, kind: input, shape index: {}]
  %s9 = inlined_call_operand.hbm [shape: f32[32,256], index: 9, kind: output, shape index: {}]
  %s10 = sld [smem:[#allocation0]]
  $region66: #{tpu_custom_call.1} parent=0
    _
  %s12 = ssub.s32 1, %s10
  %s13 = scalar_select 0, %s12, %s10
  $region1: #{tpu_custom_call.1} parent=0
    #allocation3 [shape = 'u8[8192]{0}', space=vmem, size = 0x2000, scoped, tag = 'input window, operand 0, single buffered']
    #allocation4 [shape = 's32[1]{0}', space=sflag, size = 0x4, scoped, tag = 'scoped memory for tpu_custom_call.1']
    #allocation5 [shape = 's32[1]{0}', space=sflag, size = 0x4, scoped, tag = 'scoped memory for tpu_custom_call.1']
    #allocation6 [shape = 'u8[98304]{0}', space=vmem, size = 0x18000, scoped, tag = 'input window, operand 1, single buffered']
    #allocation7 [shape = 's32[1]{0}', space=sflag, size = 0x4, scoped, tag = 'scoped memory for tpu_custom_call.1']
    #allocation8 [shape = 'u8[98304]{0}', space=vmem, size = 0x18000, scoped, tag = 'input window, operand 2, single buffered']
    #allocation9 [shape = 'u8[196608]{0}', space=vmem, size = 0x30000, scoped, tag = 'input window, operand 3, single buffered']
    #allocation10 [shape = 's32[1]{0}', space=sflag, size = 0x4, scoped, tag = 'scoped memory for tpu_custom_call.1']
    #allocation11 [shape = 'u8[65536]{0}', space=vmem, size = 0x10000, scoped, tag = 'input window, operand 4, single buffered']
    #allocation12 [shape = 'u8[32768]{0}', space=vmem, size = 0x8000, scoped, tag = 'output window, operand 0, single buffered']
    %14 = vsyncpa [#allocation4], 0
    %15 = vsyncpa [#allocation7], 0
    %16 = vsyncpa [#allocation10], 0
    %17 = vsyncpa [#allocation5], 0
    // Predicated region
    $region2: #{tpu_custom_call.1} parent=1 // pred_check
      _
    $region3: #{tpu_custom_call.1} parent=1 // pred_check_branch
      %19 = sbr.rel (0) target = $region5
    $region4: #{tpu_custom_call.1} parent=1 // pred_region
      %s21 = ssub.s32 256, 256
      %22 = vsyncadd [#allocation4], %s21
      %s23 = sshll.u32 [#allocation3], 4
      %s24 = int_to_ptr.vmem [resolvable:$true] %s23
      %29 = dma.hbm_to_vmem [thread:$0]  %s0, 256, %s24, [#allocation4], 64, 64, 4
    $region5: #{tpu_custom_call.1} parent=1 // pred_fallthru
      _
    // Predicated region
    $region6: #{tpu_custom_call.1} parent=1 // pred_check
      _
    $region7: #{tpu_custom_call.1} parent=1 // pred_check_branch
      %31 = sbr.rel (0) target = $region9
    $region8: #{tpu_custom_call.1} parent=1 // pred_region
      %s33 = ssub.s32 3072, 3072
      %34 = vsyncadd [#allocation7], %s33
      %s35 = sshll.u32 [#allocation6], 4
      %s36 = int_to_ptr.vmem [resolvable:$true] %s35
      %41 = dma.hbm_to_vmem [thread:$0]  %s1, 3072, %s36, [#allocation7], 64, 64, 4
    $region9: #{tpu_custom_call.1} parent=1 // pred_fallthru
      _
    // Predicated region
    $region10: #{tpu_custom_call.1} parent=1 // pred_check
      _
    $region11: #{tpu_custom_call.1} parent=1 // pred_check_branch
      %43 = sbr.rel (0) target = $region13
    $region12: #{tpu_custom_call.1} parent=1 // pred_region
      %s45 = ssub.s32 3072, 3072
      %46 = vsyncadd [#allocation7], %s45
      %s47 = sshll.u32 [#allocation8], 4
      %s48 = int_to_ptr.vmem [resolvable:$true] %s47
      %53 = dma.hbm_to_vmem [thread:$0]  %s2, 3072, %s48, [#allocation7], 64, 64, 4
    $region13: #{tpu_custom_call.1} parent=1 // pred_fallthru
      _
    // Predicated region
    $region14: #{tpu_custom_call.1} parent=1 // pred_check
      _
    $region15: #{tpu_custom_call.1} parent=1 // pred_check_branch
      %55 = sbr.rel (0) target = $region17
    $region16: #{tpu_custom_call.1} parent=1 // pred_region
      %s57 = ssub.s32 6144, 6144
      %58 = vsyncadd [#allocation10], %s57
      %s59 = sshll.u32 [#allocation9], 4
      %s60 = int_to_ptr.vmem [resolvable:$true] %s59
      %65 = dma.hbm_to_vmem [thread:$0]  %s3, 6144, %s60, [#allocation10], 128, 128, 8
    $region17: #{tpu_custom_call.1} parent=1 // pred_fallthru
      _
    // Predicated region
    $region18: #{tpu_custom_call.1} parent=1 // pred_check
      _
    $region19: #{tpu_custom_call.1} parent=1 // pred_check_branch
      %67 = sbr.rel (0) target = $region21
    $region20: #{tpu_custom_call.1} parent=1 // pred_region
      %s69 = ssub.s32 2048, 2048
      %70 = vsyncadd [#allocation10], %s69
      %s71 = sshll.u32 [#allocation11], 4
      %s72 = int_to_ptr.vmem [resolvable:$true] %s71
      %77 = dma.hbm_to_vmem [thread:$0]  %s4, 2048, %s72, [#allocation10], 128, 128, 8
    $region21: #{tpu_custom_call.1} parent=1 // pred_fallthru
      _
    // Predicated region
    $region22: #{tpu_custom_call.1} parent=1 // pred_check
      _
    $region23: #{tpu_custom_call.1} parent=1 // pred_check_branch
      %79 = sbr.rel (0) target = $region25
    $region24: #{tpu_custom_call.1} parent=1 // pred_region
      _
    $region25: #{tpu_custom_call.1} parent=1 // pred_fallthru
      _
    // Predicated region
    $region26: #{tpu_custom_call.1} parent=1 // pred_check
      _
    $region27: #{tpu_custom_call.1} parent=1 // pred_check_branch
      %81 = sbr.rel (0) target = $region29
    $region28: #{tpu_custom_call.1} parent=1 // pred_region
      _
    $region29: #{tpu_custom_call.1} parent=1 // pred_fallthru
      _
    // Predicated region
    $region30: #{tpu_custom_call.1} parent=1 // pred_check
      _
    $region31: #{tpu_custom_call.1} parent=1 // pred_check_branch
      %83 = sbr.rel (0) target = $region33
    $region32: #{tpu_custom_call.1} parent=1 // pred_region
      _
    $region33: #{tpu_custom_call.1} parent=1 // pred_fallthru
      _
    // Predicated region
    $region34: #{tpu_custom_call.1} parent=1 // pred_check
      _
    $region35: #{tpu_custom_call.1} parent=1 // pred_check_branch
      %85 = sbr.rel (0) target = $region37
    $region36: #{tpu_custom_call.1} parent=1 // pred_region
      _
    $region37: #{tpu_custom_call.1} parent=1 // pred_fallthru
      _
    // Predicated region
    $region38: #{tpu_custom_call.1} parent=1 // pred_check
      _
    $region39: #{tpu_custom_call.1} parent=1 // pred_check_branch
      %87 = sbr.rel (0) target = $region41
    $region40: #{tpu_custom_call.1} parent=1 // pred_region
      %88 = dma.done [#allocation4], 256
    $region41: #{tpu_custom_call.1} parent=1 // pred_fallthru
      _
    // Predicated region
    $region42: #{tpu_custom_call.1} parent=1 // pred_check
      _
    $region43: #{tpu_custom_call.1} parent=1 // pred_check_branch
      %90 = sbr.rel (0) target = $region45
    $region44: #{tpu_custom_call.1} parent=1 // pred_region
      %91 = dma.done [#allocation7], 3072
    $region45: #{tpu_custom_call.1} parent=1 // pred_fallthru
      _
    // Predicated region
    $region46: #{tpu_custom_call.1} parent=1 // pred_check
      _
    $region47: #{tpu_custom_call.1} parent=1 // pred_check_branch
      %93 = sbr.rel (0) target = $region49
    $region48: #{tpu_custom_call.1} parent=1 // pred_region
      %94 = dma.done [#allocation7], 3072
    $region49: #{tpu_custom_call.1} parent=1 // pred_fallthru
      _
    // Predicated region
    $region50: #{tpu_custom_call.1} parent=1 // pred_check
      _
    $region51: #{tpu_custom_call.1} parent=1 // pred_check_branch
      %96 = sbr.rel (0) target = $region53
    $region52: #{tpu_custom_call.1} parent=1 // pred_region
      %97 = dma.done [#allocation10], 6144
    $region53: #{tpu_custom_call.1} parent=1 // pred_fallthru
      _
    // Predicated region
    $region54: #{tpu_custom_call.1} parent=1 // pred_check
      _
    $region55: #{tpu_custom_call.1} parent=1 // pred_check_branch
      %99 = sbr.rel (0) target = $region57
    $region56: #{tpu_custom_call.1} parent=1 // pred_region
      %100 = dma.done [#allocation10], 2048
    $region57: #{tpu_custom_call.1} parent=1 // pred_fallthru
      _
    %v102 = vlaneseq
    %v103 = vshrl.u32 %v102, 7
    %v104 = vadd.s32 %v103, 8
    %v105 = vadd.s32 %v103, 16
    %v106 = vadd.s32 %v103, 24
    %v107 = vadd.s32 %v103, 32
    %v108 = vadd.s32 %v103, 40
    %vm109 = vcmp.lt.s32.totalorder %v103, 0
    %v110 = vsub.s32 0, %v103
    %v111 = vsel %vm109, %v110, %v103
    %v112 = vmul.u32.u64.compose %v111, 2863311531
    %v113 = vextract.low.u32 %v112
    %v114 = vextract.high.u32 %v112
    %v115 = vshrl.u32 %v114, 4
    %v116 = vmul.u32 %v115, 24
    %v117 = vsub.s32 %v111, %v116
    %v118 = vsub.s32 0, %v117
    %v119 = vsel %vm109, %v118, %v117
    %vm120 = vcmp.lt.s32.totalorder %v104, 0
    %v121 = vsub.s32 0, %v104
    %v122 = vsel %vm120, %v121, %v104
    %v123 = vmul.u32.u64.compose %v122, 2863311531
    %v124 = vextract.low.u32 %v123
    %v125 = vextract.high.u32 %v123
    %v126 = vshrl.u32 %v125, 4
    %v127 = vmul.u32 %v126, 24
    %v128 = vsub.s32 %v122, %v127
    %v129 = vsub.s32 0, %v128
    %v130 = vsel %vm120, %v129, %v128
    %vm131 = vcmp.lt.s32.totalorder %v105, 0
    %v132 = vsub.s32 0, %v105
    %v133 = vsel %vm131, %v132, %v105
    %v134 = vmul.u32.u64.compose %v133, 2863311531
    %v135 = vextract.low.u32 %v134
    %v136 = vextract.high.u32 %v134
    %v137 = vshrl.u32 %v136, 4
    %v138 = vmul.u32 %v137, 24
    %v139 = vsub.s32 %v133, %v138
    %v140 = vsub.s32 0, %v139
    %v141 = vsel %vm131, %v140, %v139
    %vm142 = vcmp.lt.s32.totalorder %v106, 0
    %v143 = vsub.s32 0, %v106
    %v144 = vsel %vm142, %v143, %v106
    %v145 = vmul.u32.u64.compose %v144, 2863311531
    %v146 = vextract.low.u32 %v145
    %v147 = vextract.high.u32 %v145
    %v148 = vshrl.u32 %v147, 4
    %v149 = vmul.u32 %v148, 24
    %v150 = vsub.s32 %v144, %v149
    %v151 = vsub.s32 0, %v150
    %v152 = vsel %vm142, %v151, %v150
    %vm153 = vcmp.lt.s32.totalorder %v107, 0
    %v154 = vsub.s32 0, %v107
    %v155 = vsel %vm153, %v154, %v107
    %v156 = vmul.u32.u64.compose %v155, 2863311531
    %v157 = vextract.low.u32 %v156
    %v158 = vextract.high.u32 %v156
    %v159 = vshrl.u32 %v158, 4
    %v160 = vmul.u32 %v159, 24
    %v161 = vsub.s32 %v155, %v160
    %v162 = vsub.s32 0, %v161
    %v163 = vsel %vm153, %v162, %v161
    %vm164 = vcmp.lt.s32.totalorder %v108, 0
    %v165 = vsub.s32 0, %v108
    %v166 = vsel %vm164, %v165, %v108
    %v167 = vmul.u32.u64.compose %v166, 2863311531
    %v168 = vextract.low.u32 %v167
    %v169 = vextract.high.u32 %v167
    %v170 = vshrl.u32 %v169, 4
    %v171 = vmul.u32 %v170, 24
    %v172 = vsub.s32 %v166, %v171
    %v173 = vsub.s32 0, %v172
    %v174 = vsel %vm164, %v173, %v172
    %vm175 = vcmp.ne.s32.totalorder %v119, 0
    %vm176 = vcmp.ne.s32.totalorder %v130, 0
    %vm177 = vcmp.ne.s32.totalorder %v141, 0
    %vm178 = vcmp.ne.s32.totalorder %v152, 0
    %vm179 = vcmp.ne.s32.totalorder %v163, 0
    %vm180 = vcmp.ne.s32.totalorder %v174, 0
    %vm181 = vcmp.lt.s32.totalorder %v119, 0
    %vm182 = vcmp.lt.s32.totalorder %v130, 0
    %vm183 = vcmp.lt.s32.totalorder %v141, 0
    %vm184 = vcmp.lt.s32.totalorder %v152, 0
    %vm185 = vcmp.lt.s32.totalorder %v163, 0
    %vm186 = vcmp.lt.s32.totalorder %v174, 0
    %vm187 = vmand %vm181, %vm175
    %vm188 = vmand %vm182, %vm176
    %vm189 = vmand %vm183, %vm177
    %vm190 = vmand %vm184, %vm178
    %vm191 = vmand %vm185, %vm179
    %vm192 = vmand %vm186, %vm180
    %v193 = vadd.s32 %v119, 24
    %v194 = vadd.s32 %v130, 24
    %v195 = vadd.s32 %v141, 24
    %v196 = vadd.s32 %v152, 24
    %v197 = vadd.s32 %v163, 24
    %v198 = vadd.s32 %v174, 24
    %v199 = vsel %vm187, %v193, %v119
    %v200 = vsel %vm188, %v194, %v130
    %v201 = vsel %vm189, %v195, %v141
    %v202 = vsel %vm190, %v196, %v152
    %v203 = vsel %vm191, %v197, %v163
    %v204 = vsel %vm192, %v198, %v174
    %vm205 = vcmp.ge.s32.totalorder %v199, 1
    %vm206 = vcmp.ge.s32.totalorder %v200, 1
    %vm207 = vcmp.ge.s32.totalorder %v201, 1
    %vm208 = vcmp.ge.s32.totalorder %v202, 1
    %vm209 = vcmp.ge.s32.totalorder %v203, 1
    %vm210 = vcmp.ge.s32.totalorder %v204, 1
    %vm211 = vcmp.lt.s32.totalorder %v199, 17
    %vm212 = vcmp.lt.s32.totalorder %v200, 17
    %vm213 = vcmp.lt.s32.totalorder %v201, 17
    %vm214 = vcmp.lt.s32.totalorder %v202, 17
    %vm215 = vcmp.lt.s32.totalorder %v203, 17
    %vm216 = vcmp.lt.s32.totalorder %v204, 17
    %vm217 = vmand %vm205, %vm211
    %vm218 = vmand %vm206, %vm212
    %vm219 = vmand %vm207, %vm213
    %vm220 = vmand %vm208, %vm214
    %vm221 = vmand %vm209, %vm215
    %vm222 = vmand %vm210, %vm216
    %223 = vst [vmem:[#allocation2] sm:$0x1] 0
    %224 = vst [vmem:[#allocation2 + $0x8] sm:$0xe] 0
    %v225 = vld [vmem:[#allocation3] sm:$0xf]
    %v226 = vld [vmem:[#allocation3 + $0x4] sm:$0xf]
    %v229 = vunpack.c.l.b16 %v225
    %v230 = vunpack.c.l.b16 %v226
    %v231 = vpack.c.b16 %v230, %v229
    %v232 = vrot.slane %v231, 7
    %234 = vst [vmem:[#allocation2] sm:$0xfe] %v232
    %235 = vst [vmem:[#allocation2 + $0x8] sm:$0x1] %v232
    %236 = vst [vmem:[#allocation2 + $0x8] sm:$0x10] 0
    %237 = vst [vmem:[#allocation2 + $0x10] sm:$0xe0] 0
    %v238 = vld [vmem:[#allocation3 + $0x8] sm:$0xf]
    %v239 = vld [vmem:[#allocation3 + $0xc] sm:$0xf]
    %v242 = vunpack.c.l.b16 %v238
    %v243 = vunpack.c.l.b16 %v239
    %v244 = vpack.c.b16 %v243, %v242
    %v245 = vrot.slane %v244, 3
    %247 = vst [vmem:[#allocation2 + $0x8] sm:$0xe0] %v245
    %248 = vst [vmem:[#allocation2 + $0x10] sm:$0x1f] %v245
    %v249 = vld [vmem:[#allocation2] sm:$0xff]
    %v250 = vld [vmem:[#allocation2 + $0x8] sm:$0xff]
    %v251 = vld [vmem:[#allocation2 + $0x10] sm:$0x7f]
    %v252 = vld [vmem:[#allocation6] sm:$0xf]
    %v253 = vld [vmem:[#allocation6 + $0x4] sm:$0xf]
    %v254 = vld [vmem:[#allocation6 + $0x8] sm:$0xf]
    %v255 = vld [vmem:[#allocation6 + $0xc] sm:$0xf]
    %v256 = vld [vmem:[#allocation6 + $0x10] sm:$0xf]
    %v257 = vld [vmem:[#allocation6 + $0x14] sm:$0xf]
    %v258 = vld [vmem:[#allocation6 + $0x18] sm:$0xf]
    %v259 = vld [vmem:[#allocation6 + $0x1c] sm:$0xf]
    %v260 = vld [vmem:[#allocation6 + $0x20] sm:$0xf]
    %v261 = vld [vmem:[#allocation6 + $0x24] sm:$0xf]
    %v262 = vld [vmem:[#allocation6 + $0x28] sm:$0xf]
    %v263 = vld [vmem:[#allocation6 + $0x2c] sm:$0xf]
    %v264 = vld [vmem:[#allocation6 + $0x30] sm:$0xf]
    %v265 = vld [vmem:[#allocation6 + $0x34] sm:$0xf]
    %v266 = vld [vmem:[#allocation6 + $0x38] sm:$0xf]
    %v267 = vld [vmem:[#allocation6 + $0x3c] sm:$0xf]
    %v268 = vld [vmem:[#allocation2 + $0x10] sm:$0xff]
    %s269 = scalar_lea.vmem [#allocation6], 64
    %v270 = vld [vmem:[%s269] sm:$0xf]
    %v271 = vld [vmem:[%s269 + $0x4] sm:$0xf]
    %v272 = vld [vmem:[%s269 + $0x8] sm:$0xf]
    %v273 = vld [vmem:[%s269 + $0xc] sm:$0xf]
    %v274 = vld [vmem:[%s269 + $0x10] sm:$0xf]
    %v275 = vld [vmem:[%s269 + $0x14] sm:$0xf]
    %v276 = vld [vmem:[%s269 + $0x18] sm:$0xf]
    %v277 = vld [vmem:[%s269 + $0x1c] sm:$0xf]
    %v278 = vld [vmem:[%s269 + $0x20] sm:$0xf]
    %v279 = vld [vmem:[%s269 + $0x24] sm:$0xf]
    %v280 = vld [vmem:[%s269 + $0x28] sm:$0xf]
    %v281 = vld [vmem:[%s269 + $0x2c] sm:$0xf]
    %v282 = vld [vmem:[%s269 + $0x30] sm:$0xf]
    %v283 = vld [vmem:[%s269 + $0x34] sm:$0xf]
    %v284 = vld [vmem:[%s269 + $0x38] sm:$0xf]
    %v285 = vld [vmem:[%s269 + $0x3c] sm:$0xf]
    %vm286 = vsmask.f32 7424
    %v288 = vshrl.u32 %v249, 16
    %v290 = vshll.u32 %v249, 16
    %v292 = vrot.slane %v290, 1
    %v293 = vor.u32 %v288, %v292
    %v295 = vshll.u32 %v250, 16
    %v297 = vrot.slane %v295, 1
    %v298 = vsel %vm286, %v293, %v297
    %v299 = vshrl.u32 %v250, 16
    %v301 = vor.u32 %v299, %v297
    %v303 = vshll.u32 %v268, 16
    %v305 = vrot.slane %v303, 1
    %v306 = vsel %vm286, %v301, %v305
    %v307 = vshrl.u32 %v268, 16
    %v309 = vor.u32 %v307, %v305
    %v329 = vunpack.c.l.b16 %v270
    %v330 = vunpack.c.l.b16 %v271
    %v331 = vunpack.c.l.b16 %v272
    %v332 = vunpack.c.l.b16 %v273
    %v333 = vunpack.c.l.b16 %v274
    %v334 = vunpack.c.l.b16 %v275
    %v335 = vunpack.c.l.b16 %v276
    %v336 = vunpack.c.l.b16 %v277
    %v337 = vunpack.c.l.b16 %v278
    %v338 = vunpack.c.l.b16 %v279
    %v339 = vunpack.c.l.b16 %v280
    %v340 = vunpack.c.l.b16 %v281
    %v341 = vunpack.c.l.b16 %v282
    %v342 = vunpack.c.l.b16 %v283
    %v343 = vunpack.c.l.b16 %v284
    %v344 = vunpack.c.l.b16 %v285
    %v345 = vpack.c.b16 %v330, %v329
    %v346 = vpack.c.b16 %v332, %v331
    %v347 = vpack.c.b16 %v334, %v333
    %v348 = vpack.c.b16 %v336, %v335
    %v349 = vpack.c.b16 %v338, %v337
    %v350 = vpack.c.b16 %v340, %v339
    %v351 = vpack.c.b16 %v342, %v341
    %v352 = vpack.c.b16 %v344, %v343
    %361 = vmatprep.subr.bf16.mxu0 0
    %362 = vmatpush1.bf16.msra.mxu0 %v345
    %363 = vmatprep.subr.bf16.mxu0 0
    %364 = vmatpush1.bf16.msra.mxu0 %v346
    %365 = vmatprep.subr.bf16.mxu0 0
    %366 = vmatpush1.bf16.msra.mxu0 %v347
    %367 = vmatprep.subr.bf16.mxu0 0
    %368 = vmatpush1.bf16.msra.mxu0 %v348
    %369 = vmatprep.subr.bf16.mxu0 0
    %370 = vmatpush1.bf16.msra.mxu0 %v349
    %371 = vmatprep.subr.bf16.mxu0 0
    %372 = vmatpush1.bf16.msra.mxu0 %v350
    %373 = vmatprep.subr.bf16.mxu0 0
    %374 = vmatpush1.bf16.msra.mxu0 %v351
    %375 = vmatprep.subr.bf16.mxu0 0
    %376 = vmatpush1.bf16.msra.mxu0 %v352
    %377 = vmatprep.subr.bf16.mxu0 0
    %378 = vmatpush1.bf16.msra.mxu0 0
    %379 = vmatprep.subr.bf16.mxu0 0
    %380 = vmatpush1.bf16.msra.mxu0 0
    %381 = vmatprep.subr.bf16.mxu0 0
    %382 = vmatpush1.bf16.msra.mxu0 0
    %383 = vmatprep.subr.bf16.mxu0 0
    %384 = vmatpush1.bf16.msra.mxu0 0
    %385 = vmatprep.subr.bf16.mxu0 0
    %386 = vmatpush1.bf16.msra.mxu0 0
    %387 = vmatprep.subr.bf16.mxu0 0
    %388 = vmatpush1.bf16.msra.mxu0 0
    %389 = vmatprep.subr.bf16.mxu0 0
    %390 = vmatpush1.bf16.msra.mxu0 0
    %391 = vmatprep.subr.bf16.mxu0 0
    %392 = vmatpush1.bf16.msra.mxu0 0
    %393 = vmatprep.mubr.bf16.mxu0 0
    %394 = vmatmul.mubr.bf16.gmra.mrb[0].mxu0 %v298
    %v395 = vpop.f32.mrb[0].mxu0
    %v396 = vadd.f32 0.0, %v395
    %v397 = vpop.f32.mrb[0].mxu0
    %v398 = vpop.f32.mrb[0].mxu0
    %v399 = vadd.f32 0.0, %v398
    %v400 = vpop.f32.mrb[0].mxu0
    %401 = vmatprep.mubr.bf16.mxu0 0
    %402 = vmatmul.mubr.bf16.gmra.mrb[0].mxu0 %v306
    %v403 = vpop.f32.mrb[0].mxu0
    %v404 = vadd.f32 0.0, %v403
    %v405 = vpop.f32.mrb[0].mxu0
    %v406 = vpop.f32.mrb[0].mxu0
    %v407 = vadd.f32 0.0, %v406
    %v408 = vpop.f32.mrb[0].mxu0
    %409 = vmatprep.mubr.bf16.mxu0 0
    %410 = vmatmul.mubr.bf16.gmra.mrb[0].mxu0 %v309
    %v411 = vpop.f32.mrb[0].mxu0
    %v412 = vadd.f32 0.0, %v411
    %v413 = vpop.f32.mrb[0].mxu0
    %v414 = vpop.f32.mrb[0].mxu0
    %v415 = vadd.f32 0.0, %v414
    %v416 = vpop.f32.mrb[0].mxu0
    %417 = vdwg.mxu0
    %v434 = vunpack.c.l.b16 %v252
    %v435 = vunpack.c.l.b16 %v253
    %v436 = vunpack.c.l.b16 %v254
    %v437 = vunpack.c.l.b16 %v255
    %v438 = vunpack.c.l.b16 %v256
    %v439 = vunpack.c.l.b16 %v257
    %v440 = vunpack.c.l.b16 %v258
    %v441 = vunpack.c.l.b16 %v259
    %v442 = vunpack.c.l.b16 %v260
    %v443 = vunpack.c.l.b16 %v261
    %v444 = vunpack.c.l.b16 %v262
    %v445 = vunpack.c.l.b16 %v263
    %v446 = vunpack.c.l.b16 %v264
    %v447 = vunpack.c.l.b16 %v265
    %v448 = vunpack.c.l.b16 %v266
    %v449 = vunpack.c.l.b16 %v267
    %v450 = vpack.c.b16 %v435, %v434
    %v451 = vpack.c.b16 %v437, %v436
    %v452 = vpack.c.b16 %v439, %v438
    %v453 = vpack.c.b16 %v441, %v440
    %v454 = vpack.c.b16 %v443, %v442
    %v455 = vpack.c.b16 %v445, %v444
    %v456 = vpack.c.b16 %v447, %v446
    %v457 = vpack.c.b16 %v449, %v448
    %466 = vmatprep.subr.bf16.mxu0 0
    %467 = vmatpush1.bf16.msra.mxu0 %v450
    %468 = vmatprep.subr.bf16.mxu0 0
    %469 = vmatpush1.bf16.msra.mxu0 %v451
    %470 = vmatprep.subr.bf16.mxu0 0
    %471 = vmatpush1.bf16.msra.mxu0 %v452
    %472 = vmatprep.subr.bf16.mxu0 0
    %473 = vmatpush1.bf16.msra.mxu0 %v453
    %474 = vmatprep.subr.bf16.mxu0 0
    %475 = vmatpush1.bf16.msra.mxu0 %v454
    %476 = vmatprep.subr.bf16.mxu0 0
    %477 = vmatpush1.bf16.msra.mxu0 %v455
    %478 = vmatprep.subr.bf16.mxu0 0
    %479 = vmatpush1.bf16.msra.mxu0 %v456
    %480 = vmatprep.subr.bf16.mxu0 0
    %481 = vmatpush1.bf16.msra.mxu0 %v457
    %482 = vmatprep.subr.bf16.mxu0 0
    %483 = vmatpush1.bf16.msra.mxu0 0
    %484 = vmatprep.subr.bf16.mxu0 0
    %485 = vmatpush1.bf16.msra.mxu0 0
    %486 = vmatprep.subr.bf16.mxu0 0
    %487 = vmatpush1.bf16.msra.mxu0 0
    %488 = vmatprep.subr.bf16.mxu0 0
    %489 = vmatpush1.bf16.msra.mxu0 0
    %490 = vmatprep.subr.bf16.mxu0 0
    %491 = vmatpush1.bf16.msra.mxu0 0
    %492 = vmatprep.subr.bf16.mxu0 0
    %493 = vmatpush1.bf16.msra.mxu0 0
    %494 = vmatprep.subr.bf16.mxu0 0
    %495 = vmatpush1.bf16.msra.mxu0 0
    %496 = vmatprep.subr.bf16.mxu0 0
    %497 = vmatpush1.bf16.msra.mxu0 0
    %498 = vmatprep.mubr.bf16.mxu0 0
    %499 = vmatmul.mubr.bf16.gmra.mrb[0].mxu0 %v249
    %v500 = vpop.f32.mrb[0].mxu0
    %v501 = vadd.f32 %v396, %v500
    %v502 = vpop.f32.mrb[0].mxu0
    %v503 = vpop.f32.mrb[0].mxu0
    %v504 = vadd.f32 %v399, %v503
    %v505 = vpop.f32.mrb[0].mxu0
    %506 = vmatprep.mubr.bf16.mxu0 0
    %507 = vmatmul.mubr.bf16.gmra.mrb[0].mxu0 %v250
    %v508 = vpop.f32.mrb[0].mxu0
    %v509 = vadd.f32 %v404, %v508
    %v510 = vpop.f32.mrb[0].mxu0
    %v511 = vpop.f32.mrb[0].mxu0
    %v512 = vadd.f32 %v407, %v511
    %v513 = vpop.f32.mrb[0].mxu0
    %514 = vmatprep.mubr.bf16.mxu0 0
    %515 = vmatmul.mubr.bf16.gmra.mrb[0].mxu0 %v251
    %v516 = vpop.f32.mrb[0].mxu0
    %v517 = vadd.f32 %v412, %v516
    %v518 = vpop.f32.mrb[0].mxu0
    %v519 = vpop.f32.mrb[0].mxu0
    %v520 = vadd.f32 %v415, %v519
    %v521 = vpop.f32.mrb[0].mxu0
    %522 = vdwg.mxu0
    %v523 = vld [vmem:[#allocation2] sm:$0xfe]
    %s524 = scalar_lea.vmem [#allocation6], 128
    %v525 = vld [vmem:[%s524] sm:$0xf]
    %v526 = vld [vmem:[%s524 + $0x4] sm:$0xf]
    %v527 = vld [vmem:[%s524 + $0x8] sm:$0xf]
    %v528 = vld [vmem:[%s524 + $0xc] sm:$0xf]
    %v529 = vld [vmem:[%s524 + $0x10] sm:$0xf]
    %v530 = vld [vmem:[%s524 + $0x14] sm:$0xf]
    %v531 = vld [vmem:[%s524 + $0x18] sm:$0xf]
    %v532 = vld [vmem:[%s524 + $0x1c] sm:$0xf]
    %v533 = vld [vmem:[%s524 + $0x20] sm:$0xf]
    %v534 = vld [vmem:[%s524 + $0x24] sm:$0xf]
    %v535 = vld [vmem:[%s524 + $0x28] sm:$0xf]
    %v536 = vld [vmem:[%s524 + $0x2c] sm:$0xf]
    %v537 = vld [vmem:[%s524 + $0x30] sm:$0xf]
    %v538 = vld [vmem:[%s524 + $0x34] sm:$0xf]
    %v539 = vld [vmem:[%s524 + $0x38] sm:$0xf]
    %v540 = vld [vmem:[%s524 + $0x3c] sm:$0xf]
    %vm544 = vcmask 1046528
    %v545 = vrot.slane %v523, 1
    %v546 = vrot.slane %v250, 1
    %v547 = vsel %vm544, %v545, %v546
    %v548 = vrot.slane %v268, 1
    %v549 = vsel %vm544, %v546, %v548
    %v569 = vunpack.c.l.b16 %v525
    %v570 = vunpack.c.l.b16 %v526
    %v571 = vunpack.c.l.b16 %v527
    %v572 = vunpack.c.l.b16 %v528
    %v573 = vunpack.c.l.b16 %v529
    %v574 = vunpack.c.l.b16 %v530
    %v575 = vunpack.c.l.b16 %v531
    %v576 = vunpack.c.l.b16 %v532
    %v577 = vunpack.c.l.b16 %v533
    %v578 = vunpack.c.l.b16 %v534
    %v579 = vunpack.c.l.b16 %v535
    %v580 = vunpack.c.l.b16 %v536
    %v581 = vunpack.c.l.b16 %v537
    %v582 = vunpack.c.l.b16 %v538
    %v583 = vunpack.c.l.b16 %v539
    %v584 = vunpack.c.l.b16 %v540
    %v585 = vpack.c.b16 %v570, %v569
    %v586 = vpack.c.b16 %v572, %v571
    %v587 = vpack.c.b16 %v574, %v573
    %v588 = vpack.c.b16 %v576, %v575
    %v589 = vpack.c.b16 %v578, %v577
    %v590 = vpack.c.b16 %v580, %v579
    %v591 = vpack.c.b16 %v582, %v581
    %v592 = vpack.c.b16 %v584, %v583
    %601 = vmatprep.subr.bf16.mxu0 0
    %602 = vmatpush1.bf16.msra.mxu0 %v585
    %603 = vmatprep.subr.bf16.mxu0 0
    %604 = vmatpush1.bf16.msra.mxu0 %v586
    %605 = vmatprep.subr.bf16.mxu0 0
    %606 = vmatpush1.bf16.msra.mxu0 %v587
    %607 = vmatprep.subr.bf16.mxu0 0
    %608 = vmatpush1.bf16.msra.mxu0 %v588
    %609 = vmatprep.subr.bf16.mxu0 0
    %610 = vmatpush1.bf16.msra.mxu0 %v589
    %611 = vmatprep.subr.bf16.mxu0 0
    %612 = vmatpush1.bf16.msra.mxu0 %v590
    %613 = vmatprep.subr.bf16.mxu0 0
    %614 = vmatpush1.bf16.msra.mxu0 %v591
    %615 = vmatprep.subr.bf16.mxu0 0
    %616 = vmatpush1.bf16.msra.mxu0 %v592
    %617 = vmatprep.subr.bf16.mxu0 0
    %618 = vmatpush1.bf16.msra.mxu0 0
    %619 = vmatprep.subr.bf16.mxu0 0
    %620 = vmatpush1.bf16.msra.mxu0 0
    %621 = vmatprep.subr.bf16.mxu0 0
    %622 = vmatpush1.bf16.msra.mxu0 0
    %623 = vmatprep.subr.bf16.mxu0 0
    %624 = vmatpush1.bf16.msra.mxu0 0
    %625 = vmatprep.subr.bf16.mxu0 0
    %626 = vmatpush1.bf16.msra.mxu0 0
    %627 = vmatprep.subr.bf16.mxu0 0
    %628 = vmatpush1.bf16.msra.mxu0 0
    %629 = vmatprep.subr.bf16.mxu0 0
    %630 = vmatpush1.bf16.msra.mxu0 0
    %631 = vmatprep.subr.bf16.mxu0 0
    %632 = vmatpush1.bf16.msra.mxu0 0
    %633 = vmatprep.mubr.bf16.mxu0 0
    %634 = vmatmul.mubr.bf16.gmra.mrb[0].mxu0 %v547
    %v635 = vpop.f32.mrb[0].mxu0
    %v636 = vadd.f32 0.0, %v635
    %v637 = vpop.f32.mrb[0].mxu0
    %v638 = vpop.f32.mrb[0].mxu0
    %v639 = vadd.f32 0.0, %v638
    %v640 = vpop.f32.mrb[0].mxu0
    %641 = vmatprep.mubr.bf16.mxu0 0
    %642 = vmatmul.mubr.bf16.gmra.mrb[0].mxu0 %v549
    %v643 = vpop.f32.mrb[0].mxu0
    %v644 = vadd.f32 0.0, %v643
    %v645 = vpop.f32.mrb[0].mxu0
    %v646 = vpop.f32.mrb[0].mxu0
    %v647 = vadd.f32 0.0, %v646
    %v648 = vpop.f32.mrb[0].mxu0
    %649 = vmatprep.mubr.bf16.mxu0 0
    %650 = vmatmul.mubr.bf16.gmra.mrb[0].mxu0 %v548
    %v651 = vpop.f32.mrb[0].mxu0
    %v652 = vadd.f32 0.0, %v651
    %v653 = vpop.f32.mrb[0].mxu0
    %v654 = vpop.f32.mrb[0].mxu0
    %v655 = vadd.f32 0.0, %v654
    %v656 = vpop.f32.mrb[0].mxu0
    %657 = vdwg.mxu0
    %v658 = vadd.f32 %v501, %v636
    %v659 = vadd.f32 %v504, %v639
    %v660 = vadd.f32 %v509, %v644
    %v661 = vadd.f32 %v512, %v647
    %v662 = vadd.f32 %v517, %v652
    %v663 = vadd.f32 %v520, %v655
    %v664 = vsel %vm217, 1, 0
    %v665 = vsel %vm218, 1, 0
    %v666 = vsel %vm219, 1, 0
    %v667 = vsel %vm220, 1, 0
    %v668 = vsel %vm221, 1, 0
    %v669 = vsel %vm222, 1, 0
    %vm670 = vcmp.eq.s32.totalorder %v664, 1
    %vm671 = vcmp.eq.s32.totalorder %v665, 1
    %vm672 = vcmp.eq.s32.totalorder %v666, 1
    %vm673 = vcmp.eq.s32.totalorder %v667, 1
    %vm674 = vcmp.eq.s32.totalorder %v668, 1
    %vm675 = vcmp.eq.s32.totalorder %v669, 1
    %v676 = vsel %vm670, %v658, 0.0
    %v677 = vsel %vm671, %v659, 0.0
    %v678 = vsel %vm672, %v660, 0.0
    %v679 = vsel %vm673, %v661, 0.0
    %v680 = vsel %vm674, %v662, 0.0
    %v681 = vsel %vm675, %v663, 0.0
    %v682 = vadd.f32 %v676, %v677
    %v683 = vadd.f32 %v682, %v678
    %v684 = vadd.f32 %v683, %v679
    %v685 = vadd.f32 %v684, %v680
    %vm686 = vcmask 1045504
    %v687 = vsel %vm686, %v681, 0.0
    %v688 = vadd.f32 %v685, %v687
    %v689 = vrot.slane %v688, 4
    %v690 = vadd.f32 %v688, %v689
    %v691 = vrot.slane %v690, 2
    %v692 = vadd.f32 %v690, %v691
    %v693 = vrot.slane %v692, 1
    %v694 = vadd.f32 %v692, %v693
    %v695 = vmul.f32 %v676, %v676
    %v696 = vmul.f32 %v677, %v677
    %v697 = vmul.f32 %v678, %v678
    %v698 = vmul.f32 %v679, %v679
    %v699 = vmul.f32 %v680, %v680
    %v700 = vmul.f32 %v681, %v681
    %v701 = vadd.f32 %v695, %v696
    %v702 = vadd.f32 %v701, %v697
    %v703 = vadd.f32 %v702, %v698
    %v704 = vadd.f32 %v703, %v699
    %v705 = vsel %vm686, %v700, 0.0
    %v706 = vadd.f32 %v704, %v705
    %v707 = vrot.slane %v706, 4
    %v708 = vadd.f32 %v706, %v707
    %v709 = vrot.slane %v708, 2
    %v710 = vadd.f32 %v708, %v709
    %v711 = vrot.slane %v710, 1
    %v712 = vadd.f32 %v710, %v711
    %vm713 = vcmask 1040384
    %v714 = vsel %vm713, %v694, %v712
    %715 = vrot.lane.b32.xlu0 %v714, 8
    %v716 = vpop.permute.xlu0 %715
    %v717 = vadd.f32 %v714, %v716
    %718 = vrot.lane.b32.xlu0 %v717, 16
    %v719 = vpop.permute.xlu0 %718
    %v720 = vadd.f32 %v717, %v719
    %721 = vrot.lane.b32.xlu0 %v720, 32
    %v722 = vpop.permute.xlu0 %721
    %v723 = vadd.f32 %v720, %v722
    %724 = vrot.lane.b32.xlu0 %v723, 64
    %v725 = vpop.permute.xlu0 %724
    %v726 = vadd.f32 %v723, %v725
    %v727 = vmul.f32 %v726, 0.001953125
    %v728 = vmul.f32 %v727, %v727
    %v730 = vrot.slane %v728, 7
    %v732 = vsub.f32 %v727, %v730
    %v733 = vadd.f32 %v732, 1e-05
    %v734 = vrsqrt.pop %v733
    %v735 = vld [vmem:[%s5] sm:$0x1]
    %v737 = vlaneseq
    %v738 = vshrl.u32 %v737, 7
    %v739 = vsub.s32 0, %v738
    %v740 = vrot.slane %v735, %v739
    %v742 = vmul.f32 %v734, %v740
    %v743 = vld [vmem:[%s6] sm:$0x1]
    %v745 = vrot.slane %v742, 1
    %v747 = vmul.f32 %v727, %v745
    %v748 = vsub.f32 %v743, %v747
    %v749 = vlaneseq
    %v750 = vshrl.u32 %v749, 7
    %v751 = vsub.s32 1, %v750
    %v752 = vrot.slane %v742, %v751
    %v753 = vmul.f32 %v658, %v752
    %v754 = vmul.f32 %v659, %v752
    %v755 = vmul.f32 %v660, %v752
    %v756 = vmul.f32 %v661, %v752
    %v757 = vmul.f32 %v662, %v752
    %v758 = vmul.f32 %v663, %v752
    %v760 = vlaneseq
    %v761 = vshrl.u32 %v760, 7
    %v762 = vsub.s32 0, %v761
    %v763 = vrot.slane %v748, %v762
    %v765 = vadd.f32 %v753, %v763
    %v766 = vadd.f32 %v754, %v763
    %v767 = vadd.f32 %v755, %v763
    %v768 = vadd.f32 %v756, %v763
    %v769 = vadd.f32 %v757, %v763
    %v770 = vadd.f32 %v758, %v763
    %v771 = vmax.f32 %v765, 0.0
    %v772 = vmax.f32 %v766, 0.0
    %v773 = vmax.f32 %v767, 0.0
    %v774 = vmax.f32 %v768, 0.0
    %v775 = vmax.f32 %v769, 0.0
    %v776 = vmax.f32 %v770, 0.0
    %v777 = vpack.c.bf16 %v772, %v771
    %v778 = vpack.c.bf16 %v773, %v773
    %vm779 = vsmask.f32 256
    %v781 = vshrl.u32 %v777, 16
    %v783 = vrot.slane %v781, 7
    %v784 = vshll.u32 %v777, 16
    %v786 = vor.u32 %v783, %v784
    %v788 = vshll.u32 %v778, 16
    %v790 = vsel %vm779, %v783, %v788
    %793 = vst [vmem:[#allocation2] sm:$0xfe] %v786
    %794 = vst [vmem:[#allocation2 + $0x8] sm:$0x1] %v790
    %v795 = vpack.c.bf16 %v775, %v774
    %v796 = vpack.c.bf16 %v776, %v776
    %vm797 = vsmask.f32 4352
    %v799 = vshrl.u32 %v795, 16
    %v801 = vrot.slane %v799, 3
    %v802 = vshll.u32 %v795, 16
    %v804 = vrot.slane %v802, 4
    %v805 = vor.u32 %v801, %v804
    %v807 = vshll.u32 %v796, 16
    %v809 = vrot.slane %v807, 4
    %v810 = vsel %vm797, %v805, %v809
    %813 = vst [vmem:[#allocation2 + $0x8] sm:$0xe0] %v805
    %814 = vst [vmem:[#allocation2 + $0x10] sm:$0x1f] %v810
    %v815 = vld [vmem:[#allocation2] sm:$0xff]
    %v816 = vld [vmem:[#allocation2 + $0x8] sm:$0xff]
    %v817 = vld [vmem:[#allocation2 + $0x10] sm:$0x7f]
    %v818 = vld [vmem:[#allocation8] sm:$0xf]
    %v819 = vld [vmem:[#allocation8 + $0x4] sm:$0xf]
    %v820 = vld [vmem:[#allocation8 + $0x8] sm:$0xf]
    %v821 = vld [vmem:[#allocation8 + $0xc] sm:$0xf]
    %v822 = vld [vmem:[#allocation8 + $0x10] sm:$0xf]
    %v823 = vld [vmem:[#allocation8 + $0x14] sm:$0xf]
    %v824 = vld [vmem:[#allocation8 + $0x18] sm:$0xf]
    %v825 = vld [vmem:[#allocation8 + $0x1c] sm:$0xf]
    %v826 = vld [vmem:[#allocation8 + $0x20] sm:$0xf]
    %v827 = vld [vmem:[#allocation8 + $0x24] sm:$0xf]
    %v828 = vld [vmem:[#allocation8 + $0x28] sm:$0xf]
    %v829 = vld [vmem:[#allocation8 + $0x2c] sm:$0xf]
    %v830 = vld [vmem:[#allocation8 + $0x30] sm:$0xf]
    %v831 = vld [vmem:[#allocation8 + $0x34] sm:$0xf]
    %v832 = vld [vmem:[#allocation8 + $0x38] sm:$0xf]
    %v833 = vld [vmem:[#allocation8 + $0x3c] sm:$0xf]
    %v834 = vld [vmem:[#allocation2 + $0x10] sm:$0xff]
    %s835 = scalar_lea.vmem [#allocation8], 64
    %v836 = vld [vmem:[%s835] sm:$0xf]
    %v837 = vld [vmem:[%s835 + $0x4] sm:$0xf]
    %v838 = vld [vmem:[%s835 + $0x8] sm:$0xf]
    %v839 = vld [vmem:[%s835 + $0xc] sm:$0xf]
    %v840 = vld [vmem:[%s835 + $0x10] sm:$0xf]
    %v841 = vld [vmem:[%s835 + $0x14] sm:$0xf]
    %v842 = vld [vmem:[%s835 + $0x18] sm:$0xf]
    %v843 = vld [vmem:[%s835 + $0x1c] sm:$0xf]
    %v844 = vld [vmem:[%s835 + $0x20] sm:$0xf]
    %v845 = vld [vmem:[%s835 + $0x24] sm:$0xf]
    %v846 = vld [vmem:[%s835 + $0x28] sm:$0xf]
    %v847 = vld [vmem:[%s835 + $0x2c] sm:$0xf]
    %v848 = vld [vmem:[%s835 + $0x30] sm:$0xf]
    %v849 = vld [vmem:[%s835 + $0x34] sm:$0xf]
    %v850 = vld [vmem:[%s835 + $0x38] sm:$0xf]
    %v851 = vld [vmem:[%s835 + $0x3c] sm:$0xf]
    %v853 = vshrl.u32 %v815, 16
    %v855 = vshll.u32 %v815, 16
    %v857 = vrot.slane %v855, 1
    %v858 = vor.u32 %v853, %v857
    %v860 = vshll.u32 %v816, 16
    %v862 = vrot.slane %v860, 1
    %v863 = vsel %vm286, %v858, %v862
    %v864 = vshrl.u32 %v816, 16
    %v866 = vor.u32 %v864, %v862
    %v868 = vshll.u32 %v834, 16
    %v870 = vrot.slane %v868, 1
    %v871 = vsel %vm286, %v866, %v870
    %v872 = vshrl.u32 %v834, 16
    %v874 = vor.u32 %v872, %v870
    %v894 = vunpack.c.l.b16 %v836
    %v895 = vunpack.c.l.b16 %v837
    %v896 = vunpack.c.l.b16 %v838
    %v897 = vunpack.c.l.b16 %v839
    %v898 = vunpack.c.l.b16 %v840
    %v899 = vunpack.c.l.b16 %v841
    %v900 = vunpack.c.l.b16 %v842
    %v901 = vunpack.c.l.b16 %v843
    %v902 = vunpack.c.l.b16 %v844
    %v903 = vunpack.c.l.b16 %v845
    %v904 = vunpack.c.l.b16 %v846
    %v905 = vunpack.c.l.b16 %v847
    %v906 = vunpack.c.l.b16 %v848
    %v907 = vunpack.c.l.b16 %v849
    %v908 = vunpack.c.l.b16 %v850
    %v909 = vunpack.c.l.b16 %v851
    %v910 = vpack.c.b16 %v895, %v894
    %v911 = vpack.c.b16 %v897, %v896
    %v912 = vpack.c.b16 %v899, %v898
    %v913 = vpack.c.b16 %v901, %v900
    %v914 = vpack.c.b16 %v903, %v902
    %v915 = vpack.c.b16 %v905, %v904
    %v916 = vpack.c.b16 %v907, %v906
    %v917 = vpack.c.b16 %v909, %v908
    %926 = vmatprep.subr.bf16.mxu0 0
    %927 = vmatpush1.bf16.msra.mxu0 %v910
    %928 = vmatprep.subr.bf16.mxu0 0
    %929 = vmatpush1.bf16.msra.mxu0 %v911
    %930 = vmatprep.subr.bf16.mxu0 0
    %931 = vmatpush1.bf16.msra.mxu0 %v912
    %932 = vmatprep.subr.bf16.mxu0 0
    %933 = vmatpush1.bf16.msra.mxu0 %v913
    %934 = vmatprep.subr.bf16.mxu0 0
    %935 = vmatpush1.bf16.msra.mxu0 %v914
    %936 = vmatprep.subr.bf16.mxu0 0
    %937 = vmatpush1.bf16.msra.mxu0 %v915
    %938 = vmatprep.subr.bf16.mxu0 0
    %939 = vmatpush1.bf16.msra.mxu0 %v916
    %940 = vmatprep.subr.bf16.mxu0 0
    %941 = vmatpush1.bf16.msra.mxu0 %v917
    %942 = vmatprep.subr.bf16.mxu0 0
    %943 = vmatpush1.bf16.msra.mxu0 0
    %944 = vmatprep.subr.bf16.mxu0 0
    %945 = vmatpush1.bf16.msra.mxu0 0
    %946 = vmatprep.subr.bf16.mxu0 0
    %947 = vmatpush1.bf16.msra.mxu0 0
    %948 = vmatprep.subr.bf16.mxu0 0
    %949 = vmatpush1.bf16.msra.mxu0 0
    %950 = vmatprep.subr.bf16.mxu0 0
    %951 = vmatpush1.bf16.msra.mxu0 0
    %952 = vmatprep.subr.bf16.mxu0 0
    %953 = vmatpush1.bf16.msra.mxu0 0
    %954 = vmatprep.subr.bf16.mxu0 0
    %955 = vmatpush1.bf16.msra.mxu0 0
    %956 = vmatprep.subr.bf16.mxu0 0
    %957 = vmatpush1.bf16.msra.mxu0 0
    %958 = vmatprep.mubr.bf16.mxu0 0
    %959 = vmatmul.mubr.bf16.gmra.mrb[0].mxu0 %v863
    %v960 = vpop.f32.mrb[0].mxu0
    %v961 = vadd.f32 0.0, %v960
    %v962 = vpop.f32.mrb[0].mxu0
    %v963 = vpop.f32.mrb[0].mxu0
    %v964 = vadd.f32 0.0, %v963
    %v965 = vpop.f32.mrb[0].mxu0
    %966 = vmatprep.mubr.bf16.mxu0 0
    %967 = vmatmul.mubr.bf16.gmra.mrb[0].mxu0 %v871
    %v968 = vpop.f32.mrb[0].mxu0
    %v969 = vadd.f32 0.0, %v968
    %v970 = vpop.f32.mrb[0].mxu0
    %v971 = vpop.f32.mrb[0].mxu0
    %v972 = vadd.f32 0.0, %v971
    %v973 = vpop.f32.mrb[0].mxu0
    %974 = vmatprep.mubr.bf16.mxu0 0
    %975 = vmatmul.mubr.bf16.gmra.mrb[0].mxu0 %v874
    %v976 = vpop.f32.mrb[0].mxu0
    %v977 = vadd.f32 0.0, %v976
    %v978 = vpop.f32.mrb[0].mxu0
    %v979 = vpop.f32.mrb[0].mxu0
    %v980 = vadd.f32 0.0, %v979
    %v981 = vpop.f32.mrb[0].mxu0
    %982 = vdwg.mxu0
    %v999 = vunpack.c.l.b16 %v818
    %v1000 = vunpack.c.l.b16 %v819
    %v1001 = vunpack.c.l.b16 %v820
    %v1002 = vunpack.c.l.b16 %v821
    %v1003 = vunpack.c.l.b16 %v822
    %v1004 = vunpack.c.l.b16 %v823
    %v1005 = vunpack.c.l.b16 %v824
    %v1006 = vunpack.c.l.b16 %v825
    %v1007 = vunpack.c.l.b16 %v826
    %v1008 = vunpack.c.l.b16 %v827
    %v1009 = vunpack.c.l.b16 %v828
    %v1010 = vunpack.c.l.b16 %v829
    %v1011 = vunpack.c.l.b16 %v830
    %v1012 = vunpack.c.l.b16 %v831
    %v1013 = vunpack.c.l.b16 %v832
    %v1014 = vunpack.c.l.b16 %v833
    %v1015 = vpack.c.b16 %v1000, %v999
    %v1016 = vpack.c.b16 %v1002, %v1001
    %v1017 = vpack.c.b16 %v1004, %v1003
    %v1018 = vpack.c.b16 %v1006, %v1005
    %v1019 = vpack.c.b16 %v1008, %v1007
    %v1020 = vpack.c.b16 %v1010, %v1009
    %v1021 = vpack.c.b16 %v1012, %v1011
    %v1022 = vpack.c.b16 %v1014, %v1013
    %1031 = vmatprep.subr.bf16.mxu0 0
    %1032 = vmatpush1.bf16.msra.mxu0 %v1015
    %1033 = vmatprep.subr.bf16.mxu0 0
    %1034 = vmatpush1.bf16.msra.mxu0 %v1016
    %1035 = vmatprep.subr.bf16.mxu0 0
    %1036 = vmatpush1.bf16.msra.mxu0 %v1017
    %1037 = vmatprep.subr.bf16.mxu0 0
    %1038 = vmatpush1.bf16.msra.mxu0 %v1018
    %1039 = vmatprep.subr.bf16.mxu0 0
    %1040 = vmatpush1.bf16.msra.mxu0 %v1019
    %1041 = vmatprep.subr.bf16.mxu0 0
    %1042 = vmatpush1.bf16.msra.mxu0 %v1020
    %1043 = vmatprep.subr.bf16.mxu0 0
    %1044 = vmatpush1.bf16.msra.mxu0 %v1021
    %1045 = vmatprep.subr.bf16.mxu0 0
    %1046 = vmatpush1.bf16.msra.mxu0 %v1022
    %1047 = vmatprep.subr.bf16.mxu0 0
    %1048 = vmatpush1.bf16.msra.mxu0 0
    %1049 = vmatprep.subr.bf16.mxu0 0
    %1050 = vmatpush1.bf16.msra.mxu0 0
    %1051 = vmatprep.subr.bf16.mxu0 0
    %1052 = vmatpush1.bf16.msra.mxu0 0
    %1053 = vmatprep.subr.bf16.mxu0 0
    %1054 = vmatpush1.bf16.msra.mxu0 0
    %1055 = vmatprep.subr.bf16.mxu0 0
    %1056 = vmatpush1.bf16.msra.mxu0 0
    %1057 = vmatprep.subr.bf16.mxu0 0
    %1058 = vmatpush1.bf16.msra.mxu0 0
    %1059 = vmatprep.subr.bf16.mxu0 0
    %1060 = vmatpush1.bf16.msra.mxu0 0
    %1061 = vmatprep.subr.bf16.mxu0 0
    %1062 = vmatpush1.bf16.msra.mxu0 0
    %1063 = vmatprep.mubr.bf16.mxu0 0
    %1064 = vmatmul.mubr.bf16.gmra.mrb[0].mxu0 %v815
    %v1065 = vpop.f32.mrb[0].mxu0
    %v1066 = vadd.f32 %v961, %v1065
    %v1067 = vpop.f32.mrb[0].mxu0
    %v1068 = vpop.f32.mrb[0].mxu0
    %v1069 = vadd.f32 %v964, %v1068
    %v1070 = vpop.f32.mrb[0].mxu0
    %1071 = vmatprep.mubr.bf16.mxu0 0
    %1072 = vmatmul.mubr.bf16.gmra.mrb[0].mxu0 %v816
    %v1073 = vpop.f32.mrb[0].mxu0
    %v1074 = vadd.f32 %v969, %v1073
    %v1075 = vpop.f32.mrb[0].mxu0
    %v1076 = vpop.f32.mrb[0].mxu0
    %v1077 = vadd.f32 %v972, %v1076
    %v1078 = vpop.f32.mrb[0].mxu0
    %1079 = vmatprep.mubr.bf16.mxu0 0
    %1080 = vmatmul.mubr.bf16.gmra.mrb[0].mxu0 %v817
    %v1081 = vpop.f32.mrb[0].mxu0
    %v1082 = vadd.f32 %v977, %v1081
    %v1083 = vpop.f32.mrb[0].mxu0
    %v1084 = vpop.f32.mrb[0].mxu0
    %v1085 = vadd.f32 %v980, %v1084
    %v1086 = vpop.f32.mrb[0].mxu0
    %1087 = vdwg.mxu0
    %v1088 = vld [vmem:[#allocation2] sm:$0xfe]
    %s1089 = scalar_lea.vmem [#allocation8], 128
    %v1090 = vld [vmem:[%s1089] sm:$0xf]
    %v1091 = vld [vmem:[%s1089 + $0x4] sm:$0xf]
    %v1092 = vld [vmem:[%s1089 + $0x8] sm:$0xf]
    %v1093 = vld [vmem:[%s1089 + $0xc] sm:$0xf]
    %v1094 = vld [vmem:[%s1089 + $0x10] sm:$0xf]
    %v1095 = vld [vmem:[%s1089 + $0x14] sm:$0xf]
    %v1096 = vld [vmem:[%s1089 + $0x18] sm:$0xf]
    %v1097 = vld [vmem:[%s1089 + $0x1c] sm:$0xf]
    %v1098 = vld [vmem:[%s1089 + $0x20] sm:$0xf]
    %v1099 = vld [vmem:[%s1089 + $0x24] sm:$0xf]
    %v1100 = vld [vmem:[%s1089 + $0x28] sm:$0xf]
    %v1101 = vld [vmem:[%s1089 + $0x2c] sm:$0xf]
    %v1102 = vld [vmem:[%s1089 + $0x30] sm:$0xf]
    %v1103 = vld [vmem:[%s1089 + $0x34] sm:$0xf]
    %v1104 = vld [vmem:[%s1089 + $0x38] sm:$0xf]
    %v1105 = vld [vmem:[%s1089 + $0x3c] sm:$0xf]
    %v1109 = vrot.slane %v1088, 1
    %v1110 = vrot.slane %v816, 1
    %v1111 = vsel %vm544, %v1109, %v1110
    %v1112 = vrot.slane %v834, 1
    %v1113 = vsel %vm544, %v1110, %v1112
    %v1133 = vunpack.c.l.b16 %v1090
    %v1134 = vunpack.c.l.b16 %v1091
    %v1135 = vunpack.c.l.b16 %v1092
    %v1136 = vunpack.c.l.b16 %v1093
    %v1137 = vunpack.c.l.b16 %v1094
    %v1138 = vunpack.c.l.b16 %v1095
    %v1139 = vunpack.c.l.b16 %v1096
    %v1140 = vunpack.c.l.b16 %v1097
    %v1141 = vunpack.c.l.b16 %v1098
    %v1142 = vunpack.c.l.b16 %v1099
    %v1143 = vunpack.c.l.b16 %v1100
    %v1144 = vunpack.c.l.b16 %v1101
    %v1145 = vunpack.c.l.b16 %v1102
    %v1146 = vunpack.c.l.b16 %v1103
    %v1147 = vunpack.c.l.b16 %v1104
    %v1148 = vunpack.c.l.b16 %v1105
    %v1149 = vpack.c.b16 %v1134, %v1133
    %v1150 = vpack.c.b16 %v1136, %v1135
    %v1151 = vpack.c.b16 %v1138, %v1137
    %v1152 = vpack.c.b16 %v1140, %v1139
    %v1153 = vpack.c.b16 %v1142, %v1141
    %v1154 = vpack.c.b16 %v1144, %v1143
    %v1155 = vpack.c.b16 %v1146, %v1145
    %v1156 = vpack.c.b16 %v1148, %v1147
    %1165 = vmatprep.subr.bf16.mxu0 0
    %1166 = vmatpush1.bf16.msra.mxu0 %v1149
    %1167 = vmatprep.subr.bf16.mxu0 0
    %1168 = vmatpush1.bf16.msra.mxu0 %v1150
    %1169 = vmatprep.subr.bf16.mxu0 0
    %1170 = vmatpush1.bf16.msra.mxu0 %v1151
    %1171 = vmatprep.subr.bf16.mxu0 0
    %1172 = vmatpush1.bf16.msra.mxu0 %v1152
    %1173 = vmatprep.subr.bf16.mxu0 0
    %1174 = vmatpush1.bf16.msra.mxu0 %v1153
    %1175 = vmatprep.subr.bf16.mxu0 0
    %1176 = vmatpush1.bf16.msra.mxu0 %v1154
    %1177 = vmatprep.subr.bf16.mxu0 0
    %1178 = vmatpush1.bf16.msra.mxu0 %v1155
    %1179 = vmatprep.subr.bf16.mxu0 0
    %1180 = vmatpush1.bf16.msra.mxu0 %v1156
    %1181 = vmatprep.subr.bf16.mxu0 0
    %1182 = vmatpush1.bf16.msra.mxu0 0
    %1183 = vmatprep.subr.bf16.mxu0 0
    %1184 = vmatpush1.bf16.msra.mxu0 0
    %1185 = vmatprep.subr.bf16.mxu0 0
    %1186 = vmatpush1.bf16.msra.mxu0 0
    %1187 = vmatprep.subr.bf16.mxu0 0
    %1188 = vmatpush1.bf16.msra.mxu0 0
    %1189 = vmatprep.subr.bf16.mxu0 0
    %1190 = vmatpush1.bf16.msra.mxu0 0
    %1191 = vmatprep.subr.bf16.mxu0 0
    %1192 = vmatpush1.bf16.msra.mxu0 0
    %1193 = vmatprep.subr.bf16.mxu0 0
    %1194 = vmatpush1.bf16.msra.mxu0 0
    %1195 = vmatprep.subr.bf16.mxu0 0
    %1196 = vmatpush1.bf16.msra.mxu0 0
    %1197 = vmatprep.mubr.bf16.mxu0 0
    %1198 = vmatmul.mubr.bf16.gmra.mrb[0].mxu0 %v1111
    %v1199 = vpop.f32.mrb[0].mxu0
    %v1200 = vadd.f32 0.0, %v1199
    %v1201 = vpop.f32.mrb[0].mxu0
    %v1202 = vpop.f32.mrb[0].mxu0
    %v1203 = vadd.f32 0.0, %v1202
    %v1204 = vpop.f32.mrb[0].mxu0
    %1205 = vmatprep.mubr.bf16.mxu0 0
    %1206 = vmatmul.mubr.bf16.gmra.mrb[0].mxu0 %v1113
    %v1207 = vpop.f32.mrb[0].mxu0
    %v1208 = vadd.f32 0.0, %v1207
    %v1209 = vpop.f32.mrb[0].mxu0
    %v1210 = vpop.f32.mrb[0].mxu0
    %v1211 = vadd.f32 0.0, %v1210
    %v1212 = vpop.f32.mrb[0].mxu0
    %1213 = vmatprep.mubr.bf16.mxu0 0
    %1214 = vmatmul.mubr.bf16.gmra.mrb[0].mxu0 %v1112
    %v1215 = vpop.f32.mrb[0].mxu0
    %v1216 = vadd.f32 0.0, %v1215
    %v1217 = vpop.f32.mrb[0].mxu0
    %v1218 = vpop.f32.mrb[0].mxu0
    %v1219 = vadd.f32 0.0, %v1218
    %v1220 = vpop.f32.mrb[0].mxu0
    %1221 = vdwg.mxu0
    %v1222 = vadd.f32 %v1066, %v1200
    %v1223 = vadd.f32 %v1069, %v1203
    %v1224 = vadd.f32 %v1074, %v1208
    %v1225 = vadd.f32 %v1077, %v1211
    %v1226 = vadd.f32 %v1082, %v1216
    %v1227 = vadd.f32 %v1085, %v1219
    %v1228 = vsel %vm670, %v1222, 0.0
    %v1229 = vsel %vm671, %v1223, 0.0
    %v1230 = vsel %vm672, %v1224, 0.0
    %v1231 = vsel %vm673, %v1225, 0.0
    %v1232 = vsel %vm674, %v1226, 0.0
    %v1233 = vsel %vm675, %v1227, 0.0
    %v1234 = vadd.f32 %v1228, %v1229
    %v1235 = vadd.f32 %v1234, %v1230
    %v1236 = vadd.f32 %v1235, %v1231
    %v1237 = vadd.f32 %v1236, %v1232
    %v1238 = vsel %vm686, %v1233, 0.0
    %v1239 = vadd.f32 %v1237, %v1238
    %v1240 = vrot.slane %v1239, 4
    %v1241 = vadd.f32 %v1239, %v1240
    %v1242 = vrot.slane %v1241, 2
    %v1243 = vadd.f32 %v1241, %v1242
    %v1244 = vrot.slane %v1243, 1
    %v1245 = vadd.f32 %v1243, %v1244
    %v1246 = vmul.f32 %v1228, %v1228
    %v1247 = vmul.f32 %v1229, %v1229
    %v1248 = vmul.f32 %v1230, %v1230
    %v1249 = vmul.f32 %v1231, %v1231
    %v1250 = vmul.f32 %v1232, %v1232
    %v1251 = vmul.f32 %v1233, %v1233
    %v1252 = vadd.f32 %v1246, %v1247
    %v1253 = vadd.f32 %v1252, %v1248
    %v1254 = vadd.f32 %v1253, %v1249
    %v1255 = vadd.f32 %v1254, %v1250
    %v1256 = vsel %vm686, %v1251, 0.0
    %v1257 = vadd.f32 %v1255, %v1256
    %v1258 = vrot.slane %v1257, 4
    %v1259 = vadd.f32 %v1257, %v1258
    %v1260 = vrot.slane %v1259, 2
    %v1261 = vadd.f32 %v1259, %v1260
    %v1262 = vrot.slane %v1261, 1
    %v1263 = vadd.f32 %v1261, %v1262
    %v1264 = vsel %vm713, %v1245, %v1263
    %1265 = vrot.lane.b32.xlu0 %v1264, 8
    %v1266 = vpop.permute.xlu0 %1265
    %v1267 = vadd.f32 %v1264, %v1266
    %1268 = vrot.lane.b32.xlu0 %v1267, 16
    %v1269 = vpop.permute.xlu0 %1268
    %v1270 = vadd.f32 %v1267, %v1269
    %1271 = vrot.lane.b32.xlu0 %v1270, 32
    %v1272 = vpop.permute.xlu0 %1271
    %v1273 = vadd.f32 %v1270, %v1272
    %1274 = vrot.lane.b32.xlu0 %v1273, 64
    %v1275 = vpop.permute.xlu0 %1274
    %v1276 = vadd.f32 %v1273, %v1275
    %v1277 = vmul.f32 %v1276, 0.001953125
    %v1278 = vmul.f32 %v1277, %v1277
    %v1280 = vrot.slane %v1278, 7
    %v1282 = vsub.f32 %v1277, %v1280
    %v1283 = vadd.f32 %v1282, 1e-05
    %v1284 = vrsqrt.pop %v1283
    %v1285 = vld [vmem:[%s5] sm:$0x1]
    %v1287 = vlaneseq
    %v1288 = vshrl.u32 %v1287, 7
    %v1289 = vsub.s32 0, %v1288
    %v1290 = vrot.slane %v1285, %v1289
    %v1292 = vmul.f32 %v1284, %v1290
    %v1293 = vld [vmem:[%s6] sm:$0x1]
    %v1295 = vrot.slane %v1292, 1
    %v1297 = vmul.f32 %v1277, %v1295
    %v1298 = vsub.f32 %v1293, %v1297
    %v1299 = vlaneseq
    %v1300 = vshrl.u32 %v1299, 7
    %v1301 = vsub.s32 1, %v1300
    %v1302 = vrot.slane %v1292, %v1301
    %v1303 = vmul.f32 %v1222, %v1302
    %v1304 = vmul.f32 %v1223, %v1302
    %v1305 = vmul.f32 %v1224, %v1302
    %v1306 = vmul.f32 %v1225, %v1302
    %v1307 = vmul.f32 %v1226, %v1302
    %v1308 = vmul.f32 %v1227, %v1302
    %v1310 = vlaneseq
    %v1311 = vshrl.u32 %v1310, 7
    %v1312 = vsub.s32 0, %v1311
    %v1313 = vrot.slane %v1298, %v1312
    %v1315 = vadd.f32 %v1303, %v1313
    %v1316 = vadd.f32 %v1304, %v1313
    %v1317 = vadd.f32 %v1305, %v1313
    %v1318 = vadd.f32 %v1306, %v1313
    %v1319 = vadd.f32 %v1307, %v1313
    %v1320 = vadd.f32 %v1308, %v1313
    %v1321 = vmax.f32 %v1315, 0.0
    %v1322 = vmax.f32 %v1316, 0.0
    %v1323 = vmax.f32 %v1317, 0.0
    %v1324 = vmax.f32 %v1318, 0.0
    %v1325 = vmax.f32 %v1319, 0.0
    %v1326 = vmax.f32 %v1320, 0.0
    %v1327 = vpack.c.bf16 %v1322, %v1321
    %v1328 = vpack.c.bf16 %v1323, %v1323
    %v1330 = vshrl.u32 %v1327, 16
    %v1332 = vrot.slane %v1330, 7
    %v1333 = vshll.u32 %v1327, 16
    %v1335 = vor.u32 %v1332, %v1333
    %v1337 = vshll.u32 %v1328, 16
    %v1339 = vsel %vm779, %v1332, %v1337
    %1342 = vst [vmem:[#allocation2] sm:$0xfe] %v1335
    %1343 = vst [vmem:[#allocation2 + $0x8] sm:$0x1] %v1339
    %v1344 = vpack.c.bf16 %v1325, %v1324
    %v1345 = vpack.c.bf16 %v1326, %v1326
    %v1347 = vshrl.u32 %v1344, 16
    %v1349 = vrot.slane %v1347, 3
    %v1350 = vshll.u32 %v1344, 16
    %v1352 = vrot.slane %v1350, 4
    %v1353 = vor.u32 %v1349, %v1352
    %v1355 = vshll.u32 %v1345, 16
    %v1357 = vrot.slane %v1355, 4
    %v1358 = vsel %vm797, %v1353, %v1357
    %1361 = vst [vmem:[#allocation2 + $0x8] sm:$0xe0] %v1353
    %1362 = vst [vmem:[#allocation2 + $0x10] sm:$0x1f] %v1358
    %v1363 = vld [vmem:[#allocation2] sm:$0xff]
    %v1364 = vld [vmem:[#allocation2 + $0x8] sm:$0xff]
    %v1365 = vld [vmem:[#allocation2 + $0x10] sm:$0x7f]
    %v1366 = vld [vmem:[#allocation9] sm:$0xff]
    %v1367 = vld [vmem:[#allocation9 + $0x8] sm:$0xff]
    %v1368 = vld [vmem:[#allocation9 + $0x10] sm:$0xff]
    %v1369 = vld [vmem:[#allocation9 + $0x18] sm:$0xff]
    %v1370 = vld [vmem:[#allocation9 + $0x20] sm:$0xff]
    %v1371 = vld [vmem:[#allocation9 + $0x28] sm:$0xff]
    %v1372 = vld [vmem:[#allocation9 + $0x30] sm:$0xff]
    %v1373 = vld [vmem:[#allocation9 + $0x38] sm:$0xff]
    %v1374 = vld [vmem:[#allocation9 + $0x40] sm:$0xff]
    %v1375 = vld [vmem:[#allocation9 + $0x48] sm:$0xff]
    %v1376 = vld [vmem:[#allocation9 + $0x50] sm:$0xff]
    %v1377 = vld [vmem:[#allocation9 + $0x58] sm:$0xff]
    %v1378 = vld [vmem:[#allocation9 + $0x60] sm:$0xff]
    %v1379 = vld [vmem:[#allocation9 + $0x68] sm:$0xff]
    %v1380 = vld [vmem:[#allocation9 + $0x70] sm:$0xff]
    %v1381 = vld [vmem:[#allocation9 + $0x78] sm:$0xff]
    %v1382 = vld [vmem:[#allocation2 + $0x10] sm:$0xff]
    %s1383 = scalar_lea.vmem [#allocation9], 128
    %v1384 = vld [vmem:[%s1383] sm:$0xff]
    %v1385 = vld [vmem:[%s1383 + $0x8] sm:$0xff]
    %v1386 = vld [vmem:[%s1383 + $0x10] sm:$0xff]
    %v1387 = vld [vmem:[%s1383 + $0x18] sm:$0xff]
    %v1388 = vld [vmem:[%s1383 + $0x20] sm:$0xff]
    %v1389 = vld [vmem:[%s1383 + $0x28] sm:$0xff]
    %v1390 = vld [vmem:[%s1383 + $0x30] sm:$0xff]
    %v1391 = vld [vmem:[%s1383 + $0x38] sm:$0xff]
    %v1392 = vld [vmem:[%s1383 + $0x40] sm:$0xff]
    %v1393 = vld [vmem:[%s1383 + $0x48] sm:$0xff]
    %v1394 = vld [vmem:[%s1383 + $0x50] sm:$0xff]
    %v1395 = vld [vmem:[%s1383 + $0x58] sm:$0xff]
    %v1396 = vld [vmem:[%s1383 + $0x60] sm:$0xff]
    %v1397 = vld [vmem:[%s1383 + $0x68] sm:$0xff]
    %v1398 = vld [vmem:[%s1383 + $0x70] sm:$0xff]
    %v1399 = vld [vmem:[%s1383 + $0x78] sm:$0xff]
    %v1401 = vshrl.u32 %v1363, 16
    %v1403 = vshll.u32 %v1363, 16
    %v1405 = vrot.slane %v1403, 1
    %v1406 = vor.u32 %v1401, %v1405
    %v1408 = vshll.u32 %v1364, 16
    %v1410 = vrot.slane %v1408, 1
    %v1411 = vsel %vm286, %v1406, %v1410
    %v1412 = vshrl.u32 %v1364, 16
    %v1414 = vor.u32 %v1412, %v1410
    %v1416 = vshll.u32 %v1382, 16
    %v1418 = vrot.slane %v1416, 1
    %v1419 = vsel %vm286, %v1414, %v1418
    %v1420 = vshrl.u32 %v1382, 16
    %v1422 = vor.u32 %v1420, %v1418
    %v1442 = vunpack.c.l.b16 %v1384
    %v1443 = vunpack.c.h.b16 %v1384
    %v1444 = vunpack.c.l.b16 %v1385
    %v1445 = vunpack.c.h.b16 %v1385
    %v1446 = vunpack.c.l.b16 %v1386
    %v1447 = vunpack.c.h.b16 %v1386
    %v1448 = vunpack.c.l.b16 %v1387
    %v1449 = vunpack.c.h.b16 %v1387
    %v1450 = vunpack.c.l.b16 %v1388
    %v1451 = vunpack.c.h.b16 %v1388
    %v1452 = vunpack.c.l.b16 %v1389
    %v1453 = vunpack.c.h.b16 %v1389
    %v1454 = vunpack.c.l.b16 %v1390
    %v1455 = vunpack.c.h.b16 %v1390
    %v1456 = vunpack.c.l.b16 %v1391
    %v1457 = vunpack.c.h.b16 %v1391
    %v1458 = vunpack.c.l.b16 %v1392
    %v1459 = vunpack.c.h.b16 %v1392
    %v1460 = vunpack.c.l.b16 %v1393
    %v1461 = vunpack.c.h.b16 %v1393
    %v1462 = vunpack.c.l.b16 %v1394
    %v1463 = vunpack.c.h.b16 %v1394
    %v1464 = vunpack.c.l.b16 %v1395
    %v1465 = vunpack.c.h.b16 %v1395
    %v1466 = vunpack.c.l.b16 %v1396
    %v1467 = vunpack.c.h.b16 %v1396
    %v1468 = vunpack.c.l.b16 %v1397
    %v1469 = vunpack.c.h.b16 %v1397
    %v1470 = vunpack.c.l.b16 %v1398
    %v1471 = vunpack.c.h.b16 %v1398
    %v1472 = vunpack.c.l.b16 %v1399
    %v1473 = vunpack.c.h.b16 %v1399
    %v1474 = vpack.c.b16 %v1444, %v1442
    %v1475 = vpack.c.b16 %v1445, %v1443
    %v1476 = vpack.c.b16 %v1448, %v1446
    %v1477 = vpack.c.b16 %v1449, %v1447
    %v1478 = vpack.c.b16 %v1452, %v1450
    %v1479 = vpack.c.b16 %v1453, %v1451
    %v1480 = vpack.c.b16 %v1456, %v1454
    %v1481 = vpack.c.b16 %v1457, %v1455
    %v1482 = vpack.c.b16 %v1460, %v1458
    %v1483 = vpack.c.b16 %v1461, %v1459
    %v1484 = vpack.c.b16 %v1464, %v1462
    %v1485 = vpack.c.b16 %v1465, %v1463
    %v1486 = vpack.c.b16 %v1468, %v1466
    %v1487 = vpack.c.b16 %v1469, %v1467
    %v1488 = vpack.c.b16 %v1472, %v1470
    %v1489 = vpack.c.b16 %v1473, %v1471
    %1506 = vmatprep.subr.bf16.mxu0 %v1475
    %1507 = vmatpush1.bf16.msra.mxu0 %v1474
    %1508 = vmatprep.subr.bf16.mxu0 %v1477
    %1509 = vmatpush1.bf16.msra.mxu0 %v1476
    %1510 = vmatprep.subr.bf16.mxu0 %v1479
    %1511 = vmatpush1.bf16.msra.mxu0 %v1478
    %1512 = vmatprep.subr.bf16.mxu0 %v1481
    %1513 = vmatpush1.bf16.msra.mxu0 %v1480
    %1514 = vmatprep.subr.bf16.mxu0 %v1483
    %1515 = vmatpush1.bf16.msra.mxu0 %v1482
    %1516 = vmatprep.subr.bf16.mxu0 %v1485
    %1517 = vmatpush1.bf16.msra.mxu0 %v1484
    %1518 = vmatprep.subr.bf16.mxu0 %v1487
    %1519 = vmatpush1.bf16.msra.mxu0 %v1486
    %1520 = vmatprep.subr.bf16.mxu0 %v1489
    %1521 = vmatpush1.bf16.msra.mxu0 %v1488
    %1522 = vmatprep.subr.bf16.mxu0 0
    %1523 = vmatpush1.bf16.msra.mxu0 0
    %1524 = vmatprep.subr.bf16.mxu0 0
    %1525 = vmatpush1.bf16.msra.mxu0 0
    %1526 = vmatprep.subr.bf16.mxu0 0
    %1527 = vmatpush1.bf16.msra.mxu0 0
    %1528 = vmatprep.subr.bf16.mxu0 0
    %1529 = vmatpush1.bf16.msra.mxu0 0
    %1530 = vmatprep.subr.bf16.mxu0 0
    %1531 = vmatpush1.bf16.msra.mxu0 0
    %1532 = vmatprep.subr.bf16.mxu0 0
    %1533 = vmatpush1.bf16.msra.mxu0 0
    %1534 = vmatprep.subr.bf16.mxu0 0
    %1535 = vmatpush1.bf16.msra.mxu0 0
    %1536 = vmatprep.subr.bf16.mxu0 0
    %1537 = vmatpush1.bf16.msra.mxu0 0
    %1538 = vmatprep.mubr.bf16.mxu0 0
    %1539 = vmatmul.mubr.bf16.gmra.mrb[0].mxu0 %v1411
    %v1540 = vpop.f32.mrb[0].mxu0
    %v1541 = vadd.f32 0.0, %v1540
    %v1542 = vpop.f32.mrb[0].mxu0
    %v1543 = vadd.f32 0.0, %v1542
    %v1544 = vpop.f32.mrb[0].mxu0
    %v1545 = vadd.f32 0.0, %v1544
    %v1546 = vpop.f32.mrb[0].mxu0
    %v1547 = vadd.f32 0.0, %v1546
    %1548 = vmatprep.mubr.bf16.mxu0 0
    %1549 = vmatmul.mubr.bf16.gmra.mrb[0].mxu0 %v1419
    %v1550 = vpop.f32.mrb[0].mxu0
    %v1551 = vadd.f32 0.0, %v1550
    %v1552 = vpop.f32.mrb[0].mxu0
    %v1553 = vadd.f32 0.0, %v1552
    %v1554 = vpop.f32.mrb[0].mxu0
    %v1555 = vadd.f32 0.0, %v1554
    %v1556 = vpop.f32.mrb[0].mxu0
    %v1557 = vadd.f32 0.0, %v1556
    %1558 = vmatprep.mubr.bf16.mxu0 0
    %1559 = vmatmul.mubr.bf16.gmra.mrb[0].mxu0 %v1422
    %v1560 = vpop.f32.mrb[0].mxu0
    %v1561 = vadd.f32 0.0, %v1560
    %v1562 = vpop.f32.mrb[0].mxu0
    %v1563 = vadd.f32 0.0, %v1562
    %v1564 = vpop.f32.mrb[0].mxu0
    %v1565 = vadd.f32 0.0, %v1564
    %v1566 = vpop.f32.mrb[0].mxu0
    %v1567 = vadd.f32 0.0, %v1566
    %1568 = vdwg.mxu0
    %v1585 = vunpack.c.l.b16 %v1366
    %v1586 = vunpack.c.h.b16 %v1366
    %v1587 = vunpack.c.l.b16 %v1367
    %v1588 = vunpack.c.h.b16 %v1367
    %v1589 = vunpack.c.l.b16 %v1368
    %v1590 = vunpack.c.h.b16 %v1368
    %v1591 = vunpack.c.l.b16 %v1369
    %v1592 = vunpack.c.h.b16 %v1369
    %v1593 = vunpack.c.l.b16 %v1370
    %v1594 = vunpack.c.h.b16 %v1370
    %v1595 = vunpack.c.l.b16 %v1371
    %v1596 = vunpack.c.h.b16 %v1371
    %v1597 = vunpack.c.l.b16 %v1372
    %v1598 = vunpack.c.h.b16 %v1372
    %v1599 = vunpack.c.l.b16 %v1373
    %v1600 = vunpack.c.h.b16 %v1373
    %v1601 = vunpack.c.l.b16 %v1374
    %v1602 = vunpack.c.h.b16 %v1374
    %v1603 = vunpack.c.l.b16 %v1375
    %v1604 = vunpack.c.h.b16 %v1375
    %v1605 = vunpack.c.l.b16 %v1376
    %v1606 = vunpack.c.h.b16 %v1376
    %v1607 = vunpack.c.l.b16 %v1377
    %v1608 = vunpack.c.h.b16 %v1377
    %v1609 = vunpack.c.l.b16 %v1378
    %v1610 = vunpack.c.h.b16 %v1378
    %v1611 = vunpack.c.l.b16 %v1379
    %v1612 = vunpack.c.h.b16 %v1379
    %v1613 = vunpack.c.l.b16 %v1380
    %v1614 = vunpack.c.h.b16 %v1380
    %v1615 = vunpack.c.l.b16 %v1381
    %v1616 = vunpack.c.h.b16 %v1381
    %v1617 = vpack.c.b16 %v1587, %v1585
    %v1618 = vpack.c.b16 %v1588, %v1586
    %v1619 = vpack.c.b16 %v1591, %v1589
    %v1620 = vpack.c.b16 %v1592, %v1590
    %v1621 = vpack.c.b16 %v1595, %v1593
    %v1622 = vpack.c.b16 %v1596, %v1594
    %v1623 = vpack.c.b16 %v1599, %v1597
    %v1624 = vpack.c.b16 %v1600, %v1598
    %v1625 = vpack.c.b16 %v1603, %v1601
    %v1626 = vpack.c.b16 %v1604, %v1602
    %v1627 = vpack.c.b16 %v1607, %v1605
    %v1628 = vpack.c.b16 %v1608, %v1606
    %v1629 = vpack.c.b16 %v1611, %v1609
    %v1630 = vpack.c.b16 %v1612, %v1610
    %v1631 = vpack.c.b16 %v1615, %v1613
    %v1632 = vpack.c.b16 %v1616, %v1614
    %1649 = vmatprep.subr.bf16.mxu0 %v1618
    %1650 = vmatpush1.bf16.msra.mxu0 %v1617
    %1651 = vmatprep.subr.bf16.mxu0 %v1620
    %1652 = vmatpush1.bf16.msra.mxu0 %v1619
    %1653 = vmatprep.subr.bf16.mxu0 %v1622
    %1654 = vmatpush1.bf16.msra.mxu0 %v1621
    %1655 = vmatprep.subr.bf16.mxu0 %v1624
    %1656 = vmatpush1.bf16.msra.mxu0 %v1623
    %1657 = vmatprep.subr.bf16.mxu0 %v1626
    %1658 = vmatpush1.bf16.msra.mxu0 %v1625
    %1659 = vmatprep.subr.bf16.mxu0 %v1628
    %1660 = vmatpush1.bf16.msra.mxu0 %v1627
    %1661 = vmatprep.subr.bf16.mxu0 %v1630
    %1662 = vmatpush1.bf16.msra.mxu0 %v1629
    %1663 = vmatprep.subr.bf16.mxu0 %v1632
    %1664 = vmatpush1.bf16.msra.mxu0 %v1631
    %1665 = vmatprep.subr.bf16.mxu0 0
    %1666 = vmatpush1.bf16.msra.mxu0 0
    %1667 = vmatprep.subr.bf16.mxu0 0
    %1668 = vmatpush1.bf16.msra.mxu0 0
    %1669 = vmatprep.subr.bf16.mxu0 0
    %1670 = vmatpush1.bf16.msra.mxu0 0
    %1671 = vmatprep.subr.bf16.mxu0 0
    %1672 = vmatpush1.bf16.msra.mxu0 0
    %1673 = vmatprep.subr.bf16.mxu0 0
    %1674 = vmatpush1.bf16.msra.mxu0 0
    %1675 = vmatprep.subr.bf16.mxu0 0
    %1676 = vmatpush1.bf16.msra.mxu0 0
    %1677 = vmatprep.subr.bf16.mxu0 0
    %1678 = vmatpush1.bf16.msra.mxu0 0
    %1679 = vmatprep.subr.bf16.mxu0 0
    %1680 = vmatpush1.bf16.msra.mxu0 0
    %1681 = vmatprep.mubr.bf16.mxu0 0
    %1682 = vmatmul.mubr.bf16.gmra.mrb[0].mxu0 %v1363
    %v1683 = vpop.f32.mrb[0].mxu0
    %v1684 = vadd.f32 %v1541, %v1683
    %v1685 = vpop.f32.mrb[0].mxu0
    %v1686 = vadd.f32 %v1543, %v1685
    %v1687 = vpop.f32.mrb[0].mxu0
    %v1688 = vadd.f32 %v1545, %v1687
    %v1689 = vpop.f32.mrb[0].mxu0
    %v1690 = vadd.f32 %v1547, %v1689
    %1691 = vmatprep.mubr.bf16.mxu0 0
    %1692 = vmatmul.mubr.bf16.gmra.mrb[0].mxu0 %v1364
    %v1693 = vpop.f32.mrb[0].mxu0
    %v1694 = vadd.f32 %v1551, %v1693
    %v1695 = vpop.f32.mrb[0].mxu0
    %v1696 = vadd.f32 %v1553, %v1695
    %v1697 = vpop.f32.mrb[0].mxu0
    %v1698 = vadd.f32 %v1555, %v1697
    %v1699 = vpop.f32.mrb[0].mxu0
    %v1700 = vadd.f32 %v1557, %v1699
    %1701 = vmatprep.mubr.bf16.mxu0 0
    %1702 = vmatmul.mubr.bf16.gmra.mrb[0].mxu0 %v1365
    %v1703 = vpop.f32.mrb[0].mxu0
    %v1704 = vadd.f32 %v1561, %v1703
    %v1705 = vpop.f32.mrb[0].mxu0
    %v1706 = vadd.f32 %v1563, %v1705
    %v1707 = vpop.f32.mrb[0].mxu0
    %v1708 = vadd.f32 %v1565, %v1707
    %v1709 = vpop.f32.mrb[0].mxu0
    %v1710 = vadd.f32 %v1567, %v1709
    %1711 = vdwg.mxu0
    %v1712 = vld [vmem:[#allocation2] sm:$0xfe]
    %s1713 = scalar_lea.vmem [#allocation9], 256
    %v1714 = vld [vmem:[%s1713] sm:$0xff]
    %v1715 = vld [vmem:[%s1713 + $0x8] sm:$0xff]
    %v1716 = vld [vmem:[%s1713 + $0x10] sm:$0xff]
    %v1717 = vld [vmem:[%s1713 + $0x18] sm:$0xff]
    %v1718 = vld [vmem:[%s1713 + $0x20] sm:$0xff]
    %v1719 = vld [vmem:[%s1713 + $0x28] sm:$0xff]
    %v1720 = vld [vmem:[%s1713 + $0x30] sm:$0xff]
    %v1721 = vld [vmem:[%s1713 + $0x38] sm:$0xff]
    %v1722 = vld [vmem:[%s1713 + $0x40] sm:$0xff]
    %v1723 = vld [vmem:[%s1713 + $0x48] sm:$0xff]
    %v1724 = vld [vmem:[%s1713 + $0x50] sm:$0xff]
    %v1725 = vld [vmem:[%s1713 + $0x58] sm:$0xff]
    %v1726 = vld [vmem:[%s1713 + $0x60] sm:$0xff]
    %v1727 = vld [vmem:[%s1713 + $0x68] sm:$0xff]
    %v1728 = vld [vmem:[%s1713 + $0x70] sm:$0xff]
    %v1729 = vld [vmem:[%s1713 + $0x78] sm:$0xff]
    %v1733 = vrot.slane %v1712, 1
    %v1734 = vrot.slane %v1364, 1
    %v1735 = vsel %vm544, %v1733, %v1734
    %v1736 = vrot.slane %v1382, 1
    %v1737 = vsel %vm544, %v1734, %v1736
    %v1757 = vunpack.c.l.b16 %v1714
    %v1758 = vunpack.c.h.b16 %v1714
    %v1759 = vunpack.c.l.b16 %v1715
    %v1760 = vunpack.c.h.b16 %v1715
    %v1761 = vunpack.c.l.b16 %v1716
    %v1762 = vunpack.c.h.b16 %v1716
    %v1763 = vunpack.c.l.b16 %v1717
    %v1764 = vunpack.c.h.b16 %v1717
    %v1765 = vunpack.c.l.b16 %v1718
    %v1766 = vunpack.c.h.b16 %v1718
    %v1767 = vunpack.c.l.b16 %v1719
    %v1768 = vunpack.c.h.b16 %v1719
    %v1769 = vunpack.c.l.b16 %v1720
    %v1770 = vunpack.c.h.b16 %v1720
    %v1771 = vunpack.c.l.b16 %v1721
    %v1772 = vunpack.c.h.b16 %v1721
    %v1773 = vunpack.c.l.b16 %v1722
    %v1774 = vunpack.c.h.b16 %v1722
    %v1775 = vunpack.c.l.b16 %v1723
    %v1776 = vunpack.c.h.b16 %v1723
    %v1777 = vunpack.c.l.b16 %v1724
    %v1778 = vunpack.c.h.b16 %v1724
    %v1779 = vunpack.c.l.b16 %v1725
    %v1780 = vunpack.c.h.b16 %v1725
    %v1781 = vunpack.c.l.b16 %v1726
    %v1782 = vunpack.c.h.b16 %v1726
    %v1783 = vunpack.c.l.b16 %v1727
    %v1784 = vunpack.c.h.b16 %v1727
    %v1785 = vunpack.c.l.b16 %v1728
    %v1786 = vunpack.c.h.b16 %v1728
    %v1787 = vunpack.c.l.b16 %v1729
    %v1788 = vunpack.c.h.b16 %v1729
    %v1789 = vpack.c.b16 %v1759, %v1757
    %v1790 = vpack.c.b16 %v1760, %v1758
    %v1791 = vpack.c.b16 %v1763, %v1761
    %v1792 = vpack.c.b16 %v1764, %v1762
    %v1793 = vpack.c.b16 %v1767, %v1765
    %v1794 = vpack.c.b16 %v1768, %v1766
    %v1795 = vpack.c.b16 %v1771, %v1769
    %v1796 = vpack.c.b16 %v1772, %v1770
    %v1797 = vpack.c.b16 %v1775, %v1773
    %v1798 = vpack.c.b16 %v1776, %v1774
    %v1799 = vpack.c.b16 %v1779, %v1777
    %v1800 = vpack.c.b16 %v1780, %v1778
    %v1801 = vpack.c.b16 %v1783, %v1781
    %v1802 = vpack.c.b16 %v1784, %v1782
    %v1803 = vpack.c.b16 %v1787, %v1785
    %v1804 = vpack.c.b16 %v1788, %v1786
    %1821 = vmatprep.subr.bf16.mxu0 %v1790
    %1822 = vmatpush1.bf16.msra.mxu0 %v1789
    %1823 = vmatprep.subr.bf16.mxu0 %v1792
    %1824 = vmatpush1.bf16.msra.mxu0 %v1791
    %1825 = vmatprep.subr.bf16.mxu0 %v1794
    %1826 = vmatpush1.bf16.msra.mxu0 %v1793
    %1827 = vmatprep.subr.bf16.mxu0 %v1796
    %1828 = vmatpush1.bf16.msra.mxu0 %v1795
    %1829 = vmatprep.subr.bf16.mxu0 %v1798
    %1830 = vmatpush1.bf16.msra.mxu0 %v1797
    %1831 = vmatprep.subr.bf16.mxu0 %v1800
    %1832 = vmatpush1.bf16.msra.mxu0 %v1799
    %1833 = vmatprep.subr.bf16.mxu0 %v1802
    %1834 = vmatpush1.bf16.msra.mxu0 %v1801
    %1835 = vmatprep.subr.bf16.mxu0 %v1804
    %1836 = vmatpush1.bf16.msra.mxu0 %v1803
    %1837 = vmatprep.subr.bf16.mxu0 0
    %1838 = vmatpush1.bf16.msra.mxu0 0
    %1839 = vmatprep.subr.bf16.mxu0 0
    %1840 = vmatpush1.bf16.msra.mxu0 0
    %1841 = vmatprep.subr.bf16.mxu0 0
    %1842 = vmatpush1.bf16.msra.mxu0 0
    %1843 = vmatprep.subr.bf16.mxu0 0
    %1844 = vmatpush1.bf16.msra.mxu0 0
    %1845 = vmatprep.subr.bf16.mxu0 0
    %1846 = vmatpush1.bf16.msra.mxu0 0
    %1847 = vmatprep.subr.bf16.mxu0 0
    %1848 = vmatpush1.bf16.msra.mxu0 0
    %1849 = vmatprep.subr.bf16.mxu0 0
    %1850 = vmatpush1.bf16.msra.mxu0 0
    %1851 = vmatprep.subr.bf16.mxu0 0
    %1852 = vmatpush1.bf16.msra.mxu0 0
    %1853 = vmatprep.mubr.bf16.mxu0 0
    %1854 = vmatmul.mubr.bf16.gmra.mrb[0].mxu0 %v1735
    %v1855 = vpop.f32.mrb[0].mxu0
    %v1856 = vadd.f32 0.0, %v1855
    %v1857 = vpop.f32.mrb[0].mxu0
    %v1858 = vadd.f32 0.0, %v1857
    %v1859 = vpop.f32.mrb[0].mxu0
    %v1860 = vadd.f32 0.0, %v1859
    %v1861 = vpop.f32.mrb[0].mxu0
    %v1862 = vadd.f32 0.0, %v1861
    %1863 = vmatprep.mubr.bf16.mxu0 0
    %1864 = vmatmul.mubr.bf16.gmra.mrb[0].mxu0 %v1737
    %v1865 = vpop.f32.mrb[0].mxu0
    %v1866 = vadd.f32 0.0, %v1865
    %v1867 = vpop.f32.mrb[0].mxu0
    %v1868 = vadd.f32 0.0, %v1867
    %v1869 = vpop.f32.mrb[0].mxu0
    %v1870 = vadd.f32 0.0, %v1869
    %v1871 = vpop.f32.mrb[0].mxu0
    %v1872 = vadd.f32 0.0, %v1871
    %1873 = vmatprep.mubr.bf16.mxu0 0
    %1874 = vmatmul.mubr.bf16.gmra.mrb[0].mxu0 %v1736
    %v1875 = vpop.f32.mrb[0].mxu0
    %v1876 = vadd.f32 0.0, %v1875
    %v1877 = vpop.f32.mrb[0].mxu0
    %v1878 = vadd.f32 0.0, %v1877
    %v1879 = vpop.f32.mrb[0].mxu0
    %v1880 = vadd.f32 0.0, %v1879
    %v1881 = vpop.f32.mrb[0].mxu0
    %v1882 = vadd.f32 0.0, %v1881
    %1883 = vdwg.mxu0
    %v1884 = vadd.f32 %v1684, %v1856
    %v1885 = vadd.f32 %v1686, %v1858
    %v1886 = vadd.f32 %v1688, %v1860
    %v1887 = vadd.f32 %v1690, %v1862
    %v1888 = vadd.f32 %v1694, %v1866
    %v1889 = vadd.f32 %v1696, %v1868
    %v1890 = vadd.f32 %v1698, %v1870
    %v1891 = vadd.f32 %v1700, %v1872
    %v1892 = vadd.f32 %v1704, %v1876
    %v1893 = vadd.f32 %v1706, %v1878
    %v1894 = vadd.f32 %v1708, %v1880
    %v1895 = vadd.f32 %v1710, %v1882
    %v1896 = vsel %vm670, %v1884, 0.0
    %v1897 = vsel %vm670, %v1885, 0.0
    %v1898 = vsel %vm671, %v1886, 0.0
    %v1899 = vsel %vm671, %v1887, 0.0
    %v1900 = vsel %vm672, %v1888, 0.0
    %v1901 = vsel %vm672, %v1889, 0.0
    %v1902 = vsel %vm673, %v1890, 0.0
    %v1903 = vsel %vm673, %v1891, 0.0
    %v1904 = vsel %vm674, %v1892, 0.0
    %v1905 = vsel %vm674, %v1893, 0.0
    %v1906 = vsel %vm675, %v1894, 0.0
    %v1907 = vsel %vm675, %v1895, 0.0
    %v1908 = vadd.f32 %v1896, %v1898
    %v1909 = vadd.f32 %v1908, %v1900
    %v1910 = vadd.f32 %v1909, %v1902
    %v1911 = vadd.f32 %v1910, %v1904
    %v1912 = vsel %vm686, %v1906, 0.0
    %v1913 = vadd.f32 %v1911, %v1912
    %v1914 = vrot.slane %v1913, 4
    %v1915 = vadd.f32 %v1913, %v1914
    %v1916 = vrot.slane %v1915, 2
    %v1917 = vadd.f32 %v1915, %v1916
    %v1918 = vrot.slane %v1917, 1
    %v1919 = vadd.f32 %v1917, %v1918
    %v1920 = vadd.f32 %v1897, %v1899
    %v1921 = vadd.f32 %v1920, %v1901
    %v1922 = vadd.f32 %v1921, %v1903
    %v1923 = vadd.f32 %v1922, %v1905
    %v1924 = vsel %vm686, %v1907, 0.0
    %v1925 = vadd.f32 %v1923, %v1924
    %v1926 = vrot.slane %v1925, 4
    %v1927 = vadd.f32 %v1925, %v1926
    %v1928 = vrot.slane %v1927, 2
    %v1929 = vadd.f32 %v1927, %v1928
    %v1930 = vrot.slane %v1929, 1
    %v1931 = vadd.f32 %v1929, %v1930
    %v1932 = vmul.f32 %v1896, %v1896
    %v1933 = vmul.f32 %v1897, %v1897
    %v1934 = vmul.f32 %v1898, %v1898
    %v1935 = vmul.f32 %v1899, %v1899
    %v1936 = vmul.f32 %v1900, %v1900
    %v1937 = vmul.f32 %v1901, %v1901
    %v1938 = vmul.f32 %v1902, %v1902
    %v1939 = vmul.f32 %v1903, %v1903
    %v1940 = vmul.f32 %v1904, %v1904
    %v1941 = vmul.f32 %v1905, %v1905
    %v1942 = vmul.f32 %v1906, %v1906
    %v1943 = vmul.f32 %v1907, %v1907
    %v1944 = vadd.f32 %v1932, %v1934
    %v1945 = vadd.f32 %v1944, %v1936
    %v1946 = vadd.f32 %v1945, %v1938
    %v1947 = vadd.f32 %v1946, %v1940
    %v1948 = vsel %vm686, %v1942, 0.0
    %v1949 = vadd.f32 %v1947, %v1948
    %v1950 = vrot.slane %v1949, 4
    %v1951 = vadd.f32 %v1949, %v1950
    %v1952 = vrot.slane %v1951, 2
    %v1953 = vadd.f32 %v1951, %v1952
    %v1954 = vrot.slane %v1953, 1
    %v1955 = vadd.f32 %v1953, %v1954
    %v1956 = vadd.f32 %v1933, %v1935
    %v1957 = vadd.f32 %v1956, %v1937
    %v1958 = vadd.f32 %v1957, %v1939
    %v1959 = vadd.f32 %v1958, %v1941
    %v1960 = vsel %vm686, %v1943, 0.0
    %v1961 = vadd.f32 %v1959, %v1960
    %v1962 = vrot.slane %v1961, 4
    %v1963 = vadd.f32 %v1961, %v1962
    %v1964 = vrot.slane %v1963, 2
    %v1965 = vadd.f32 %v1963, %v1964
    %v1966 = vrot.slane %v1965, 1
    %v1967 = vadd.f32 %v1965, %v1966
    %v1968 = vsel %vm713, %v1919, %v1955
    %v1969 = vsel %vm713, %v1931, %v1967
    %1970 = vrot.lane.b32.xlu0 %v1968, 16
    %v1971 = vpop.permute.xlu0 %1970
    %1972 = vrot.lane.b32.xlu0 %v1969, 16
    %v1973 = vpop.permute.xlu0 %1972
    %v1974 = vlaneseq
    %v1975 = vand.u32 %v1974, 127
    %vm1976 = vcmp.lt.s32.totalorder %v1975, 16
    %v1977 = vsel %vm1976, %v1971, %v1973
    %v1978 = vsel %vm1976, %v1973, %v1971
    %v1979 = vadd.f32 %v1968, %v1978
    %v1980 = vadd.f32 %v1969, %v1977
    %1981 = vrot.lane.b32.xlu0 %v1979, 32
    %v1982 = vpop.permute.xlu0 %1981
    %1983 = vrot.lane.b32.xlu0 %v1980, 32
    %v1984 = vpop.permute.xlu0 %1983
    %vm1985 = vcmp.lt.s32.totalorder %v1975, 32
    %v1986 = vsel %vm1985, %v1982, %v1984
    %v1987 = vsel %vm1985, %v1984, %v1982
    %v1988 = vadd.f32 %v1979, %v1987
    %v1989 = vadd.f32 %v1980, %v1986
    %1990 = vrot.lane.b32.xlu0 %v1988, 64
    %v1991 = vpop.permute.xlu0 %1990
    %1992 = vrot.lane.b32.xlu0 %v1989, 64
    %v1993 = vpop.permute.xlu0 %1992
    %vm1994 = vcmp.lt.s32.totalorder %v1975, 64
    %v1995 = vsel %vm1994, %v1991, %v1993
    %v1996 = vsel %vm1994, %v1993, %v1991
    %v1997 = vadd.f32 %v1988, %v1996
    %v1998 = vadd.f32 %v1989, %v1995
    %v1999 = vadd.f32 %v1997, %v1998
    %v2000 = vmul.f32 %v1999, 0.001953125
    %v2001 = vmul.f32 %v2000, %v2000
    %v2003 = vrot.slane %v2001, 7
    %v2005 = vsub.f32 %v2000, %v2003
    %v2006 = vadd.f32 %v2005, 1e-05
    %v2007 = vrsqrt.pop %v2006
    %v2008 = vld [vmem:[%s7] sm:$0x3]
    %v2010 = vlaneseq
    %v2011 = vshrl.u32 %v2010, 7
    %v2012 = vsub.s32 0, %v2011
    %v2013 = vrot.slane %v2008, %v2012
    %v2014 = vlaneseq
    %v2015 = vshrl.u32 %v2014, 7
    %v2016 = vsub.s32 1, %v2015
    %v2017 = vrot.slane %v2008, %v2016
    %v2020 = vmul.f32 %v2007, %v2013
    %v2021 = vmul.f32 %v2007, %v2017
    %v2022 = vld [vmem:[%s8] sm:$0x3]
    %v2025 = vrot.slane %v2020, 1
    %v2026 = vrot.slane %v2021, 1
    %v2029 = vmul.f32 %v2000, %v2025
    %v2030 = vmul.f32 %v2000, %v2026
    %v2033 = vcombine.low %v2029, %v2030
    %v2035 = vunpack.c.l.s4 1966171168
    %v2036 = vunpack.c.0.s8 %v2035
    %v2037 = vlaneseq
    %v2038 = vshrl.u32 %v2037, 7
    %v2039 = vsub.s32 %v2036, %v2038
    %v2040 = vrot.slane %v2033, %v2039
    %v2042 = vunpack.c.l.s4 1966171168
    %v2043 = vunpack.c.0.s8 %v2042
    %v2044 = vlaneseq
    %v2045 = vshrl.u32 %v2044, 7
    %v2046 = vsub.s32 %v2043, %v2045
    %v2047 = vrot.slane %v2040, %v2046
    %v2049 = vsub.f32 %v2022, %v2047
    %v2050 = vlaneseq
    %v2051 = vshrl.u32 %v2050, 7
    %v2052 = vsub.s32 1, %v2051
    %v2053 = vrot.slane %v2020, %v2052
    %v2054 = vlaneseq
    %v2055 = vshrl.u32 %v2054, 7
    %v2056 = vsub.s32 1, %v2055
    %v2057 = vrot.slane %v2021, %v2056
    %v2058 = vmul.f32 %v1884, %v2053
    %v2059 = vmul.f32 %v1885, %v2057
    %v2060 = vmul.f32 %v1886, %v2053
    %v2061 = vmul.f32 %v1887, %v2057
    %v2062 = vmul.f32 %v1888, %v2053
    %v2063 = vmul.f32 %v1889, %v2057
    %v2064 = vmul.f32 %v1890, %v2053
    %v2065 = vmul.f32 %v1891, %v2057
    %v2066 = vmul.f32 %v1892, %v2053
    %v2067 = vmul.f32 %v1893, %v2057
    %v2068 = vmul.f32 %v1894, %v2053
    %v2069 = vmul.f32 %v1895, %v2057
    %v2071 = vlaneseq
    %v2072 = vshrl.u32 %v2071, 7
    %v2073 = vsub.s32 0, %v2072
    %v2074 = vrot.slane %v2049, %v2073
    %v2075 = vlaneseq
    %v2076 = vshrl.u32 %v2075, 7
    %v2077 = vsub.s32 1, %v2076
    %v2078 = vrot.slane %v2049, %v2077
    %v2081 = vadd.f32 %v2058, %v2074
    %v2082 = vadd.f32 %v2059, %v2078
    %v2083 = vadd.f32 %v2060, %v2074
    %v2084 = vadd.f32 %v2061, %v2078
    %v2085 = vadd.f32 %v2062, %v2074
    %v2086 = vadd.f32 %v2063, %v2078
    %v2087 = vadd.f32 %v2064, %v2074
    %v2088 = vadd.f32 %v2065, %v2078
    %v2089 = vadd.f32 %v2066, %v2074
    %v2090 = vadd.f32 %v2067, %v2078
    %v2091 = vadd.f32 %v2068, %v2074
    %v2092 = vadd.f32 %v2069, %v2078
    %v2093 = vld [vmem:[#allocation3] sm:$0xf]
    %v2094 = vld [vmem:[#allocation3 + $0x4] sm:$0xf]
    %v2095 = vld [vmem:[#allocation3 + $0x8] sm:$0xf]
    %v2096 = vld [vmem:[#allocation3 + $0xc] sm:$0xf]
    %v2097 = vld [vmem:[#allocation11] sm:$0xff]
    %v2098 = vld [vmem:[#allocation11 + $0x8] sm:$0xff]
    %v2099 = vld [vmem:[#allocation11 + $0x10] sm:$0xff]
    %v2100 = vld [vmem:[#allocation11 + $0x18] sm:$0xff]
    %v2101 = vld [vmem:[#allocation11 + $0x20] sm:$0xff]
    %v2102 = vld [vmem:[#allocation11 + $0x28] sm:$0xff]
    %v2103 = vld [vmem:[#allocation11 + $0x30] sm:$0xff]
    %v2104 = vld [vmem:[#allocation11 + $0x38] sm:$0xff]
    %v2105 = vld [vmem:[#allocation11 + $0x40] sm:$0xff]
    %v2106 = vld [vmem:[#allocation11 + $0x48] sm:$0xff]
    %v2107 = vld [vmem:[#allocation11 + $0x50] sm:$0xff]
    %v2108 = vld [vmem:[#allocation11 + $0x58] sm:$0xff]
    %v2109 = vld [vmem:[#allocation11 + $0x60] sm:$0xff]
    %v2110 = vld [vmem:[#allocation11 + $0x68] sm:$0xff]
    %v2111 = vld [vmem:[#allocation11 + $0x70] sm:$0xff]
    %v2112 = vld [vmem:[#allocation11 + $0x78] sm:$0xff]
    %v2117 = vunpack.c.l.b16 %v2093
    %v2118 = vunpack.c.l.b16 %v2094
    %v2119 = vunpack.c.l.b16 %v2095
    %v2120 = vunpack.c.l.b16 %v2096
    %v2121 = vpack.c.b16 %v2118, %v2117
    %v2122 = vpack.c.b16 %v2120, %v2119
    %v2141 = vunpack.c.l.b16 %v2097
    %v2142 = vunpack.c.h.b16 %v2097
    %v2143 = vunpack.c.l.b16 %v2098
    %v2144 = vunpack.c.h.b16 %v2098
    %v2145 = vunpack.c.l.b16 %v2099
    %v2146 = vunpack.c.h.b16 %v2099
    %v2147 = vunpack.c.l.b16 %v2100
    %v2148 = vunpack.c.h.b16 %v2100
    %v2149 = vunpack.c.l.b16 %v2101
    %v2150 = vunpack.c.h.b16 %v2101
    %v2151 = vunpack.c.l.b16 %v2102
    %v2152 = vunpack.c.h.b16 %v2102
    %v2153 = vunpack.c.l.b16 %v2103
    %v2154 = vunpack.c.h.b16 %v2103
    %v2155 = vunpack.c.l.b16 %v2104
    %v2156 = vunpack.c.h.b16 %v2104
    %v2157 = vunpack.c.l.b16 %v2105
    %v2158 = vunpack.c.h.b16 %v2105
    %v2159 = vunpack.c.l.b16 %v2106
    %v2160 = vunpack.c.h.b16 %v2106
    %v2161 = vunpack.c.l.b16 %v2107
    %v2162 = vunpack.c.h.b16 %v2107
    %v2163 = vunpack.c.l.b16 %v2108
    %v2164 = vunpack.c.h.b16 %v2108
    %v2165 = vunpack.c.l.b16 %v2109
    %v2166 = vunpack.c.h.b16 %v2109
    %v2167 = vunpack.c.l.b16 %v2110
    %v2168 = vunpack.c.h.b16 %v2110
    %v2169 = vunpack.c.l.b16 %v2111
    %v2170 = vunpack.c.h.b16 %v2111
    %v2171 = vunpack.c.l.b16 %v2112
    %v2172 = vunpack.c.h.b16 %v2112
    %v2173 = vpack.c.b16 %v2143, %v2141
    %v2174 = vpack.c.b16 %v2144, %v2142
    %v2175 = vpack.c.b16 %v2147, %v2145
    %v2176 = vpack.c.b16 %v2148, %v2146
    %v2177 = vpack.c.b16 %v2151, %v2149
    %v2178 = vpack.c.b16 %v2152, %v2150
    %v2179 = vpack.c.b16 %v2155, %v2153
    %v2180 = vpack.c.b16 %v2156, %v2154
    %v2181 = vpack.c.b16 %v2159, %v2157
    %v2182 = vpack.c.b16 %v2160, %v2158
    %v2183 = vpack.c.b16 %v2163, %v2161
    %v2184 = vpack.c.b16 %v2164, %v2162
    %v2185 = vpack.c.b16 %v2167, %v2165
    %v2186 = vpack.c.b16 %v2168, %v2166
    %v2187 = vpack.c.b16 %v2171, %v2169
    %v2188 = vpack.c.b16 %v2172, %v2170
    %2205 = vmatprep.subr.bf16.mxu0 %v2174
    %2206 = vmatpush1.bf16.msra.mxu0 %v2173
    %2207 = vmatprep.subr.bf16.mxu0 %v2176
    %2208 = vmatpush1.bf16.msra.mxu0 %v2175
    %2209 = vmatprep.subr.bf16.mxu0 %v2178
    %2210 = vmatpush1.bf16.msra.mxu0 %v2177
    %2211 = vmatprep.subr.bf16.mxu0 %v2180
    %2212 = vmatpush1.bf16.msra.mxu0 %v2179
    %2213 = vmatprep.subr.bf16.mxu0 %v2182
    %2214 = vmatpush1.bf16.msra.mxu0 %v2181
    %2215 = vmatprep.subr.bf16.mxu0 %v2184
    %2216 = vmatpush1.bf16.msra.mxu0 %v2183
    %2217 = vmatprep.subr.bf16.mxu0 %v2186
    %2218 = vmatpush1.bf16.msra.mxu0 %v2185
    %2219 = vmatprep.subr.bf16.mxu0 %v2188
    %2220 = vmatpush1.bf16.msra.mxu0 %v2187
    %2221 = vmatprep.subr.bf16.mxu0 0
    %2222 = vmatpush1.bf16.msra.mxu0 0
    %2223 = vmatprep.subr.bf16.mxu0 0
    %2224 = vmatpush1.bf16.msra.mxu0 0
    %2225 = vmatprep.subr.bf16.mxu0 0
    %2226 = vmatpush1.bf16.msra.mxu0 0
    %2227 = vmatprep.subr.bf16.mxu0 0
    %2228 = vmatpush1.bf16.msra.mxu0 0
    %2229 = vmatprep.subr.bf16.mxu0 0
    %2230 = vmatpush1.bf16.msra.mxu0 0
    %2231 = vmatprep.subr.bf16.mxu0 0
    %2232 = vmatpush1.bf16.msra.mxu0 0
    %2233 = vmatprep.subr.bf16.mxu0 0
    %2234 = vmatpush1.bf16.msra.mxu0 0
    %2235 = vmatprep.subr.bf16.mxu0 0
    %2236 = vmatpush1.bf16.msra.mxu0 0
    %2237 = vmatprep.mubr.bf16.mxu0 0
    %2238 = vmatmul.mubr.bf16.gmra.mrb[0].mxu0 %v2121
    %v2239 = vpop.f32.mrb[0].mxu0
    %v2240 = vadd.f32 0.0, %v2239
    %v2241 = vpop.f32.mrb[0].mxu0
    %v2242 = vadd.f32 0.0, %v2241
    %v2243 = vpop.f32.mrb[0].mxu0
    %v2244 = vadd.f32 0.0, %v2243
    %v2245 = vpop.f32.mrb[0].mxu0
    %v2246 = vadd.f32 0.0, %v2245
    %2247 = vmatprep.mubr.bf16.mxu0 0
    %2248 = vmatmul.mubr.bf16.gmra.mrb[0].mxu0 %v2122
    %v2249 = vpop.f32.mrb[0].mxu0
    %v2250 = vadd.f32 0.0, %v2249
    %v2251 = vpop.f32.mrb[0].mxu0
    %v2252 = vadd.f32 0.0, %v2251
    %v2253 = vpop.f32.mrb[0].mxu0
    %v2254 = vadd.f32 0.0, %v2253
    %v2255 = vpop.f32.mrb[0].mxu0
    %v2256 = vadd.f32 0.0, %v2255
    %2257 = vdwg.mxu0
    %v2262 = vrot.slane %v2240, 7
    %v2263 = vrot.slane %v2242, 7
    %v2264 = vrot.slane %v2244, 7
    %v2265 = vsel %vm713, %v2262, %v2264
    %v2266 = vrot.slane %v2246, 7
    %v2267 = vsel %vm713, %v2263, %v2266
    %v2274 = vadd.f32 %v2081, %v2262
    %v2275 = vadd.f32 %v2082, %v2263
    %v2276 = vadd.f32 %v2083, %v2265
    %v2277 = vadd.f32 %v2084, %v2267
    %v2278 = vadd.f32 %v2085, %v2264
    %v2279 = vadd.f32 %v2086, %v2266
    %v2280 = vmax.f32 %v2274, 0.0
    %v2281 = vmax.f32 %v2275, 0.0
    %v2282 = vmax.f32 %v2276, 0.0
    %v2283 = vmax.f32 %v2277, 0.0
    %v2284 = vmax.f32 %v2278, 0.0
    %v2285 = vmax.f32 %v2279, 0.0
    %vm2292 = vcmask 1046528
    %v2293 = vrot.slane %v2280, 1
    %v2294 = vrot.slane %v2282, 1
    %v2295 = vsel %vm2292, %v2293, %v2294
    %v2296 = vrot.slane %v2281, 1
    %v2297 = vrot.slane %v2283, 1
    %v2298 = vsel %vm2292, %v2296, %v2297
    %v2299 = vrot.slane %v2284, 1
    %v2300 = vsel %vm2292, %v2294, %v2299
    %v2301 = vrot.slane %v2285, 1
    %v2302 = vsel %vm2292, %v2297, %v2301
    %2307 = vst [vmem:[#allocation12] sm:$0xff] %v2295
    %2308 = vst [vmem:[#allocation12 + $0x8] sm:$0xff] %v2298
    %2309 = vst [vmem:[#allocation12 + $0x10] sm:$0xff] %v2300
    %2310 = vst [vmem:[#allocation12 + $0x18] sm:$0xff] %v2302
    %v2315 = vrot.slane %v2250, 7
    %v2316 = vrot.slane %v2252, 7
    %v2317 = vrot.slane %v2254, 7
    %v2318 = vsel %vm713, %v2315, %v2317
    %v2319 = vrot.slane %v2256, 7
    %v2320 = vsel %vm713, %v2316, %v2319
    %v2327 = vadd.f32 %v2087, %v2315
    %v2328 = vadd.f32 %v2088, %v2316
    %v2329 = vadd.f32 %v2089, %v2318
    %v2330 = vadd.f32 %v2090, %v2320
    %v2331 = vadd.f32 %v2091, %v2317
    %v2332 = vadd.f32 %v2092, %v2319
    %v2333 = vmax.f32 %v2327, 0.0
    %v2334 = vmax.f32 %v2328, 0.0
    %v2335 = vmax.f32 %v2329, 0.0
    %v2336 = vmax.f32 %v2330, 0.0
    %v2337 = vmax.f32 %v2331, 0.0
    %v2338 = vmax.f32 %v2332, 0.0
    %v2345 = vrot.slane %v2333, 1
    %v2346 = vrot.slane %v2335, 1
    %v2347 = vsel %vm2292, %v2345, %v2346
    %v2348 = vrot.slane %v2334, 1
    %v2349 = vrot.slane %v2336, 1
    %v2350 = vsel %vm2292, %v2348, %v2349
    %v2351 = vrot.slane %v2337, 1
    %v2352 = vsel %vm2292, %v2346, %v2351
    %v2353 = vrot.slane %v2338, 1
    %v2354 = vsel %vm2292, %v2349, %v2353
    %2359 = vst [vmem:[#allocation12 + $0x20] sm:$0xff] %v2347
    %2360 = vst [vmem:[#allocation12 + $0x28] sm:$0xff] %v2350
    %2361 = vst [vmem:[#allocation12 + $0x30] sm:$0xff] %v2352
    %2362 = vst [vmem:[#allocation12 + $0x38] sm:$0xff] %v2354
    // Predicated region
    $region58: #{tpu_custom_call.1} parent=1 // pred_check
      _
    $region59: #{tpu_custom_call.1} parent=1 // pred_check_branch
      %2364 = sbr.rel (0) target = $region61
    $region60: #{tpu_custom_call.1} parent=1 // pred_region
      %s2366 = ssub.s32 1024, 1024
      %2367 = vsyncadd [#allocation5], %s2366
      %s2368 = sshll.u32 [#allocation12], 4
      %s2369 = int_to_ptr.vmem [resolvable:$true] %s2368
      %2374 = dma.vmem_to_hbm [thread:$0]  %s2369, 1024, %s9, [#allocation5], 256, 256, 16
    $region61: #{tpu_custom_call.1} parent=1 // pred_fallthru
      _
    // Predicated region
    $region62: #{tpu_custom_call.1} parent=1 // pred_check
      _
    $region63: #{tpu_custom_call.1} parent=1 // pred_check_branch
      %2376 = sbr.rel (0) target = $region65
    $region64: #{tpu_custom_call.1} parent=1 // pred_region
      %2377 = dma.done [#allocation5], 1024
    $region65: #{tpu_custom_call.1} parent=1 // pred_fallthru
      _
    %2378 = vsyncpa [#allocation4], 1
    %2379 = vsyncpa [#allocation7], 1
    %2380 = vsyncpa [#allocation10], 1
    %2381 = vsyncpa [#allocation5], 1

</llo_original>
